<compile_context>
chip_gen: v5e
topology: v5e:2x2
jax: 0.10.0
libtpu: 0.0.40
codegen_flags: <defaults>
</compile_context>

<pallas_src>
import functools

import jax
import jax.numpy as jnp
from jax.experimental import pallas as pl
from jax.experimental.pallas import tpu as pltpu

# ----------------------------- configuration --------------------------------
FEATURE_TYPES = {(0, 8): "coords", (8, 12): "numbers"}
POINT_EMB_DIM = 8            # point_embedding_dim (% 4 == 0)
CAT_POINTS_EMB_DIM = 16      # cat_points_embedding_dim
ITEM_EMB_DIM = 32            # item_embedding_dim
NUM_LAYERS = 2               # num_layers

_coords, _numbers = [], []
for (_l, _r), _t in FEATURE_TYPES.items():
    (_coords if _t == "coords" else _numbers).extend(range(_l, _r))
COORDS_IDXS = sorted(_coords)
NUMBERS_IDXS = sorted(_numbers)

N_COORDS = len(COORDS_IDXS)                       # 8
N_POINTS = N_COORDS // 2                          # 4
N_NUMBERS = len(NUMBERS_IDXS)                     # 4
COORDS_EMB_DIM = N_POINTS * CAT_POINTS_EMB_DIM    # 64
NUMBER_EMB_DIM = N_NUMBERS                        # 4
COORD_MLP_IN = N_POINTS * POINT_EMB_DIM           # 32
N_FEATURES = N_COORDS + N_NUMBERS                 # 12
CONCAT_DIM = COORDS_EMB_DIM + NUMBER_EMB_DIM      # 68

LN_EPS = 1e-5
LEAKY_SLOPE = 0.01


def _ru(x, m):
    return -(-x // m) * m


# ---- packed-weight buffer layouts (bf16 row offsets 16-aligned: sublane pack) --
# WB32 (bf16): wide weights whose output width is 32 lanes.
PE_R = 0                                              # pe_w_big   (8, 32)
MW0C_R = _ru(PE_R + N_COORDS, 16)                     # mw0 coords (64, 32)
MH_R = _ru(MW0C_R + COORDS_EMB_DIM, 16)               # head layer l (32, 32) each
WB32_ROWS = _ru(MH_R + NUM_LAYERS * ITEM_EMB_DIM, 16)
WB32_COLS = ITEM_EMB_DIM                              # 32

# WB64 (bf16): coord-branch matrices (output width 64).
CW1_R = 0                                             # cw1' (LN folded) (32, 64)
CW2_R = _ru(CW1_R + COORD_MLP_IN, 16)                 # cw2              (64, 64)
WB64_ROWS = CW2_R + COORDS_EMB_DIM
WB64_COLS = COORDS_EMB_DIM                            # 64

# SW (f32, 64 lanes): one row per bias vector + every 4-wide weight's rows.
B_PE, B_CB1, B_CB2, B_NB1, B_NB2, B_MB0, B_MHB0 = 0, 1, 2, 3, 4, 5, 6
R_NW1 = 8                                             # nw1' rows (4 x 4 lanes)
R_NW2 = 12                                            # nw2  rows (4 x 4 lanes)
R_W0N = 16                                            # mw0 numbers rows (4 x 32)
SW_ROWS = _ru(R_W0N + NUMBER_EMB_DIM, 8)              # 24
SW_COLS = 64


# ------------------------------- kernel -------------------------------------
def _ln_normalize(x):
    """LayerNorm without affine (gamma/beta folded into the next Linear)."""
    mu = jnp.mean(x, axis=-1, keepdims=True)
    var = jnp.mean((x - mu) ** 2, axis=-1, keepdims=True)
    return (x - mu) * jax.lax.rsqrt(var + LN_EPS)


def _leaky_relu(x):
    return jnp.where(x >= 0, x, LEAKY_SLOPE * x)


def item_encoder_kernel(item_ref, wb64_ref, wb32_ref, sw_ref, out_ref):
    bf16 = jnp.bfloat16
    item = item_ref[...]                                # (T, 12) f32
    coords = item[:, 0:N_COORDS]                        # (T, 8) contiguous lanes
    numbers = item[:, N_COORDS:N_FEATURES]              # (T, 4)

    def small_linear(x, row0, k_in, out_w):
        # x @ W with K = k_in (tiny): explicit VPU broadcast-mul-add, f32.
        acc = x[:, 0:1] * sw_ref[row0:row0 + 1, 0:out_w]
        for k in range(1, k_in):
            acc = acc + x[:, k:k + 1] * sw_ref[row0 + k:row0 + k + 1, 0:out_w]
        return acc

    # ---------------- coord branch (MXU, bf16 operands / f32 acc) ----------------
    # per-point Linear(2 -> POINT_EMB_DIM) as one block-diagonal matmul
    w_pe = wb32_ref[PE_R:PE_R + N_COORDS, :]            # (8, 32) bf16
    pe = jnp.dot(coords.astype(bf16), w_pe, preferred_element_type=jnp.float32)
    pe = pe + sw_ref[B_PE:B_PE + 1, 0:COORD_MLP_IN]

    h = _ln_normalize(pe)                               # f32 stats; affine folded
    w1 = wb64_ref[CW1_R:CW1_R + COORD_MLP_IN, :]        # (32, 64) bf16
    h = jnp.dot(h.astype(bf16), w1, preferred_element_type=jnp.float32)
    h = _leaky_relu(h + sw_ref[B_CB1:B_CB1 + 1, 0:COORDS_EMB_DIM])
    w2 = wb64_ref[CW2_R:CW2_R + COORDS_EMB_DIM, :]      # (64, 64) bf16
    h = jnp.dot(h.astype(bf16), w2, preferred_element_type=jnp.float32)
    coords_emb = _leaky_relu(h + sw_ref[B_CB2:B_CB2 + 1, 0:COORDS_EMB_DIM])

    # ---------------- number branch (pure VPU, f32: only 4 features) -------------
    g = _ln_normalize(numbers)
    g = _leaky_relu(small_linear(g, R_NW1, N_NUMBERS, NUMBER_EMB_DIM)
                    + sw_ref[B_NB1:B_NB1 + 1, 0:NUMBER_EMB_DIM])
    numbers_emb = (small_linear(g, R_NW2, NUMBER_EMB_DIM, NUMBER_EMB_DIM)
                   + sw_ref[B_NB2:B_NB2 + 1, 0:NUMBER_EMB_DIM])

    # ---------------- head MLP (concat folded into a split matmul) ---------------
    # coords half on the MXU; 4-wide numbers half on the VPU (overlaps with MXU).
    w0c = wb32_ref[MW0C_R:MW0C_R + COORDS_EMB_DIM, :]   # (64, 32) bf16
    x = jnp.dot(coords_emb.astype(bf16), w0c, preferred_element_type=jnp.float32)
    x = x + small_linear(numbers_emb, R_W0N, NUMBER_EMB_DIM, ITEM_EMB_DIM)
    x = x + sw_ref[B_MB0:B_MB0 + 1, 0:ITEM_EMB_DIM]
    for layer in range(NUM_LAYERS):
        x = _leaky_relu(x)
        # dropout: inference mode -> identity
        wl = wb32_ref[MH_R + layer * ITEM_EMB_DIM:
                      MH_R + (layer + 1) * ITEM_EMB_DIM, :]
        x = (jnp.dot(x.astype(bf16), wl, preferred_element_type=jnp.float32)
             + sw_ref[B_MHB0 + layer:B_MHB0 + layer + 1, 0:ITEM_EMB_DIM])

    # TODO(synk): lane-dense (T//4, 128) output repack skipped pending an A/B —
    # the in-kernel sublane->lane relayout likely eats the vst.msk win here.
    out_ref[...] = x.astype(out_ref.dtype)


# ------------------------------ parameters ----------------------------------
def _uniform(key, shape, fan_in):
    bound = 1.0 / jnp.sqrt(jnp.float32(fan_in))
    return jax.random.uniform(key, shape, jnp.float32, -bound, bound)


def init_params(key):
    ks = list(jax.random.split(key, 20))
    p = {}
    # LinearPointEncoder: Linear(2 -> POINT_EMB_DIM), stored [in, out]
    p["pe_w"] = _uniform(ks[0], (2, POINT_EMB_DIM), 2)
    p["pe_b"] = _uniform(ks[1], (POINT_EMB_DIM,), 2)
    # CoordMLPEncoder.mlp: LayerNorm -> Linear -> LeakyReLU -> Linear -> LeakyReLU
    p["cln_g"] = jnp.ones((COORD_MLP_IN,), jnp.float32)
    p["cln_b"] = jnp.zeros((COORD_MLP_IN,), jnp.float32)
    p["cw1"] = _uniform(ks[2], (COORD_MLP_IN, COORDS_EMB_DIM), COORD_MLP_IN)
    p["cb1"] = _uniform(ks[3], (COORDS_EMB_DIM,), COORD_MLP_IN)
    p["cw2"] = _uniform(ks[4], (COORDS_EMB_DIM, COORDS_EMB_DIM), COORDS_EMB_DIM)
    p["cb2"] = _uniform(ks[5], (COORDS_EMB_DIM,), COORDS_EMB_DIM)
    # NumberEncoder.mlp: LayerNorm -> Linear -> LeakyReLU -> Linear
    p["nln_g"] = jnp.ones((N_NUMBERS,), jnp.float32)
    p["nln_b"] = jnp.zeros((N_NUMBERS,), jnp.float32)
    p["nw1"] = _uniform(ks[6], (N_NUMBERS, NUMBER_EMB_DIM), N_NUMBERS)
    p["nb1"] = _uniform(ks[7], (NUMBER_EMB_DIM,), N_NUMBERS)
    p["nw2"] = _uniform(ks[8], (NUMBER_EMB_DIM, NUMBER_EMB_DIM), NUMBER_EMB_DIM)
    p["nb2"] = _uniform(ks[9], (NUMBER_EMB_DIM,), NUMBER_EMB_DIM)
    # ItemEncoder.mlp: Linear(concat) + NUM_LAYERS x (LeakyReLU, Dropout, Linear)
    p["mw0"] = _uniform(ks[10], (CONCAT_DIM, ITEM_EMB_DIM), CONCAT_DIM)
    p["mb0"] = _uniform(ks[11], (ITEM_EMB_DIM,), CONCAT_DIM)
    p["mhw"] = jnp.stack(
        [_uniform(ks[12 + i], (ITEM_EMB_DIM, ITEM_EMB_DIM), ITEM_EMB_DIM)
         for i in range(NUM_LAYERS)])
    p["mhb"] = jnp.stack(
        [_uniform(ks[12 + NUM_LAYERS + i], (ITEM_EMB_DIM,), ITEM_EMB_DIM)
         for i in range(NUM_LAYERS)])
    return p


def pack_params(params):
    """Run once outside jit: fold LN affines, build the block-diagonal point
    encoder, pack everything into 3 buffers (2 x bf16 weights, 1 x f32 small)."""
    f32 = jnp.float32

    # block-diagonal point-encoder weight: coords(B,2P) @ W_big == per-point linear
    pe_w_big = jnp.zeros((N_COORDS, COORD_MLP_IN), f32)
    for pt in range(N_POINTS):
        pe_w_big = pe_w_big.at[2 * pt:2 * pt + 2,
                               pt * POINT_EMB_DIM:(pt + 1) * POINT_EMB_DIM
                               ].set(params["pe_w"])
    pe_b_big = jnp.tile(params["pe_b"], (N_POINTS,))

    # fold LayerNorm affine into the following Linear (numerically identical)
    cw1p = params["cln_g"][:, None] * params["cw1"]
    cb1p = params["cln_b"] @ params["cw1"] + params["cb1"]
    nw1p = params["nln_g"][:, None] * params["nw1"]
    nb1p = params["nln_b"] @ params["nw1"] + params["nb1"]

    mw0c = params["mw0"][:COORDS_EMB_DIM]     # (64, 32)
    mw0n = params["mw0"][COORDS_EMB_DIM:]     # (4, 32)

    wb64 = jnp.zeros((WB64_ROWS, WB64_COLS), f32)
    wb64 = wb64.at[CW1_R:CW1_R + COORD_MLP_IN, :].set(cw1p)
    wb64 = wb64.at[CW2_R:CW2_R + COORDS_EMB_DIM, :].set(params["cw2"])

    wb32 = jnp.zeros((WB32_ROWS, WB32_COLS), f32)
    wb32 = wb32.at[PE_R:PE_R + N_COORDS, :].set(pe_w_big)
    wb32 = wb32.at[MW0C_R:MW0C_R + COORDS_EMB_DIM, :].set(mw0c)
    for layer in range(NUM_LAYERS):
        wb32 = wb32.at[MH_R + layer * ITEM_EMB_DIM:
                       MH_R + (layer + 1) * ITEM_EMB_DIM, :].set(params["mhw"][layer])

    sw = jnp.zeros((SW_ROWS, SW_COLS), f32)
    sw = sw.at[B_PE, 0:COORD_MLP_IN].set(pe_b_big)
    sw = sw.at[B_CB1, 0:COORDS_EMB_DIM].set(cb1p)
    sw = sw.at[B_CB2, 0:COORDS_EMB_DIM].set(params["cb2"])
    sw = sw.at[B_NB1, 0:NUMBER_EMB_DIM].set(nb1p)
    sw = sw.at[B_NB2, 0:NUMBER_EMB_DIM].set(params["nb2"])
    sw = sw.at[B_MB0, 0:ITEM_EMB_DIM].set(params["mb0"])
    for layer in range(NUM_LAYERS):
        sw = sw.at[B_MHB0 + layer, 0:ITEM_EMB_DIM].set(params["mhb"][layer])
    sw = sw.at[R_NW1:R_NW1 + N_NUMBERS, 0:NUMBER_EMB_DIM].set(nw1p)
    sw = sw.at[R_NW2:R_NW2 + NUMBER_EMB_DIM, 0:NUMBER_EMB_DIM].set(params["nw2"])
    sw = sw.at[R_W0N:R_W0N + NUMBER_EMB_DIM, 0:ITEM_EMB_DIM].set(mw0n)

    return {"wb64": wb64.astype(jnp.bfloat16),
            "wb32": wb32.astype(jnp.bfloat16),
            "smallw": sw}


# -------------------------------- wrapper ------------------------------------
@functools.partial(jax.jit, static_argnames=("tile_b",))
def item_encoder_forward(item, packed, tile_b=1024):
    """item: float32 [B, N_FEATURES] -> [B, ITEM_EMB_DIM]"""
    item = item.astype(jnp.float32)
    B = item.shape[0]

    # Reorder features to [coords | numbers] only if not already contiguous
    # (for this FEATURE_TYPES config it is a no-op: no gather emitted).
    perm = list(COORDS_IDXS) + list(NUMBERS_IDXS)
    if perm != list(range(N_FEATURES)):
        item = item[:, jnp.asarray(perm)]

    tb = _ru(min(tile_b, _ru(B, 8)), 8)       # batch tile, multiple of 8 sublanes
    bp = _ru(B, tb)
    if bp != B:                               # pad to a whole number of tiles
        item = jnp.pad(item, ((0, bp - B), (0, 0)))
    grid = (bp // tb,)

    out = pl.pallas_call(
        item_encoder_kernel,
        out_shape=jax.ShapeDtypeStruct((bp, ITEM_EMB_DIM), jnp.float32),
        grid=grid,
        in_specs=[
            pl.BlockSpec((tb, N_FEATURES), lambda i: (i, 0)),
            # weights: constant index map -> DMA'd once, VMEM-resident across steps
            pl.BlockSpec((WB64_ROWS, WB64_COLS), lambda i: (0, 0)),
            pl.BlockSpec((WB32_ROWS, WB32_COLS), lambda i: (0, 0)),
            pl.BlockSpec((SW_ROWS, SW_COLS), lambda i: (0, 0)),
        ],
        out_specs=pl.BlockSpec((tb, ITEM_EMB_DIM), lambda i: (i, 0)),
        compiler_params=pltpu.CompilerParams(
            dimension_semantics=("parallel",)),   # dual-TC sharding on v7x
    )(item, packed["wb64"], packed["wb32"], packed["smallw"])
    return out[:B]


# ----------------------- pure-JAX reference (f32) ----------------------------
def item_encoder_reference(item, params):
    item = item.astype(jnp.float32)
    coords = item[:, jnp.asarray(COORDS_IDXS)]
    numbers = item[:, jnp.asarray(NUMBERS_IDXS)]
    bsz = item.shape[0]

    def ln(x, g, b):
        mu = x.mean(-1, keepdims=True)
        var = ((x - mu) ** 2).mean(-1, keepdims=True)
        return (x - mu) / jnp.sqrt(var + LN_EPS) * g + b

    lrelu = lambda x: jnp.where(x >= 0, x, LEAKY_SLOPE * x)

    pts = coords.reshape(bsz, N_POINTS, 2)
    pe = jnp.einsum("bpi,io->bpo", pts, params["pe_w"]) + params["pe_b"]
    pe = pe.reshape(bsz, COORD_MLP_IN)
    h = ln(pe, params["cln_g"], params["cln_b"])
    h = lrelu(h @ params["cw1"] + params["cb1"])
    coords_emb = lrelu(h @ params["cw2"] + params["cb2"])

    g = ln(numbers, params["nln_g"], params["nln_b"])
    g = lrelu(g @ params["nw1"] + params["nb1"])
    numbers_emb = g @ params["nw2"] + params["nb2"]

    x = jnp.concatenate([coords_emb, numbers_emb], -1) @ params["mw0"] + params["mb0"]
    for layer in range(NUM_LAYERS):
        x = lrelu(x) @ params["mhw"][layer] + params["mhb"][layer]
    return x


# --------------------------------- main --------------------------------------
if __name__ == "__main__":
    key = jax.random.PRNGKey(0)
    k_item, k_params = jax.random.split(key)

    BATCH = 200   # small demo; tile_b=64 exercises a multi-step grid + padding
    item_np = jax.random.normal(k_item, (BATCH, N_FEATURES), jnp.float32)
    params = init_params(k_params)
    packed = pack_params(params)          # built once, outside the jitted path

    out = item_encoder_forward(item_np, packed, tile_b=64)
    out = jax.block_until_ready(out)

    assert out.shape == (BATCH, ITEM_EMB_DIM)
    assert bool(jnp.all(jnp.isfinite(out)))

    ref = item_encoder_reference(item_np, params)
    max_err = float(jnp.max(jnp.abs(out - ref)))
    assert max_err < 0.15, f"max abs err vs f32 reference: {max_err}"

    print("KERNEL_OK")
</pallas_src>

<mosaic_0001>
module attributes {stable_mosaic.version = 11 : i64} {
  func.func @item_encoder_kernel(%arg0: i32, %arg1: memref<64x12xf32, #tpu.memory_space<vmem>>, %arg2: memref<96x64xbf16, #tpu.memory_space<vmem>>, %arg3: memref<144x32xbf16, #tpu.memory_space<vmem>>, %arg4: memref<24x64xf32, #tpu.memory_space<vmem>>, %arg5: memref<64x32xf32, #tpu.memory_space<vmem>>) attributes {dimension_semantics = [#tpu.dimension_semantics<parallel>], iteration_bounds = array<i64: 4>, scalar_prefetch = 0 : i64, scratch_operands = 0 : i64, tpu.core_type = #tpu.core_type<tc>, window_params = [{transform_indices = @transform_0, window_bounds = array<i64: 64, 12>}, {pipeline_mode = #tpu.pipeline_mode<synchronous>, transform_indices = @transform_1, window_bounds = array<i64: 96, 64>}, {pipeline_mode = #tpu.pipeline_mode<synchronous>, transform_indices = @transform_2, window_bounds = array<i64: 144, 32>}, {pipeline_mode = #tpu.pipeline_mode<synchronous>, transform_indices = @transform_3, window_bounds = array<i64: 24, 64>}, {transform_indices = @transform_4, window_bounds = array<i64: 64, 32>}]} {
    %c0 = arith.constant 0 : index
    %c0_0 = arith.constant 0 : index
    %0 = vector.load %arg1[%c0, %c0_0] : memref<64x12xf32, #tpu.memory_space<vmem>>, vector<64x12xf32>
    %1 = vector.extract_strided_slice %0 {offsets = [0, 0], sizes = [64, 8], strides = [1, 1]} : vector<64x12xf32> to vector<64x8xf32>
    %2 = vector.extract_strided_slice %0 {offsets = [0, 8], sizes = [64, 4], strides = [1, 1]} : vector<64x12xf32> to vector<64x4xf32>
    %c0_1 = arith.constant 0 : index
    %c0_2 = arith.constant 0 : index
    %3 = vector.load %arg3[%c0_1, %c0_2] : memref<144x32xbf16, #tpu.memory_space<vmem>>, vector<8x32xbf16>
    %4 = arith.truncf %1 : vector<64x8xf32> to vector<64x8xbf16>
    %cst = arith.constant dense<0.000000e+00> : vector<64x32xf32>
    %5 = tpu.matmul %4, %3, %cst {dimension_numbers = #tpu.dot_dimension_numbers<[1], [0], [0], [1], [0, 0, 1, 1], [], []>} : vector<64x8xbf16>, vector<8x32xbf16>, vector<64x32xf32> -> vector<64x32xf32>
    %c0_3 = arith.constant 0 : index
    %c0_4 = arith.constant 0 : index
    %6 = vector.load %arg4[%c0_3, %c0_4] : memref<24x64xf32, #tpu.memory_space<vmem>>, vector<1x32xf32>
    %7 = vector.broadcast %6 : vector<1x32xf32> to vector<64x32xf32>
    %8 = arith.addf %5, %7 : vector<64x32xf32>
    %cst_5 = arith.constant dense<0.000000e+00> : vector<64xf32>
    %9 = vector.multi_reduction <add>, %8, %cst_5 [1] : vector<64x32xf32> to vector<64xf32>
    %10 = vector.shape_cast %9 : vector<64xf32> to vector<64x1xf32>
    %cst_6 = arith.constant 3.200000e+01 : f32
    %11 = vector.broadcast %cst_6 : f32 to vector<64x1xf32>
    %12 = arith.divf %10, %11 : vector<64x1xf32>
    %13 = vector.broadcast %12 : vector<64x1xf32> to vector<64x32xf32>
    %14 = arith.subf %8, %13 : vector<64x32xf32>
    %15 = arith.mulf %14, %14 : vector<64x32xf32>
    %cst_7 = arith.constant dense<0.000000e+00> : vector<64xf32>
    %16 = vector.multi_reduction <add>, %15, %cst_7 [1] : vector<64x32xf32> to vector<64xf32>
    %17 = vector.shape_cast %16 : vector<64xf32> to vector<64x1xf32>
    %cst_8 = arith.constant 3.200000e+01 : f32
    %18 = vector.broadcast %cst_8 : f32 to vector<64x1xf32>
    %19 = arith.divf %17, %18 : vector<64x1xf32>
    %20 = vector.broadcast %12 : vector<64x1xf32> to vector<64x32xf32>
    %21 = arith.subf %8, %20 : vector<64x32xf32>
    %cst_9 = arith.constant 9.99999974E-6 : f32
    %22 = vector.broadcast %cst_9 : f32 to vector<64x1xf32>
    %23 = arith.addf %19, %22 : vector<64x1xf32>
    %24 = math.rsqrt %23 : vector<64x1xf32>
    %25 = vector.broadcast %24 : vector<64x1xf32> to vector<64x32xf32>
    %26 = arith.mulf %21, %25 : vector<64x32xf32>
    %c0_10 = arith.constant 0 : index
    %c0_11 = arith.constant 0 : index
    %27 = vector.load %arg2[%c0_10, %c0_11] : memref<96x64xbf16, #tpu.memory_space<vmem>>, vector<32x64xbf16>
    %28 = arith.truncf %26 : vector<64x32xf32> to vector<64x32xbf16>
    %cst_12 = arith.constant dense<0.000000e+00> : vector<64x64xf32>
    %29 = tpu.matmul %28, %27, %cst_12 {dimension_numbers = #tpu.dot_dimension_numbers<[1], [0], [0], [1], [0, 0, 1, 1], [], []>} : vector<64x32xbf16>, vector<32x64xbf16>, vector<64x64xf32> -> vector<64x64xf32>
    %c1 = arith.constant 1 : index
    %c0_13 = arith.constant 0 : index
    %30 = vector.load %arg4[%c1, %c0_13] : memref<24x64xf32, #tpu.memory_space<vmem>>, vector<1x64xf32>
    %31 = vector.broadcast %30 : vector<1x64xf32> to vector<64x64xf32>
    %32 = arith.addf %29, %31 : vector<64x64xf32>
    %cst_14 = arith.constant 0.000000e+00 : f32
    %33 = vector.broadcast %cst_14 : f32 to vector<64x64xf32>
    %34 = arith.cmpf oge, %32, %33 : vector<64x64xf32>
    %cst_15 = arith.constant 0.00999999977 : f32
    %35 = vector.broadcast %cst_15 : f32 to vector<64x64xf32>
    %36 = arith.mulf %35, %32 : vector<64x64xf32>
    %37 = arith.select %34, %32, %36 : vector<64x64xi1>, vector<64x64xf32>
    %c32 = arith.constant 32 : index
    %c0_16 = arith.constant 0 : index
    %38 = vector.load %arg2[%c32, %c0_16] : memref<96x64xbf16, #tpu.memory_space<vmem>>, vector<64x64xbf16>
    %39 = arith.truncf %37 : vector<64x64xf32> to vector<64x64xbf16>
    %cst_17 = arith.constant dense<0.000000e+00> : vector<64x64xf32>
    %40 = tpu.matmul %39, %38, %cst_17 {dimension_numbers = #tpu.dot_dimension_numbers<[1], [0], [0], [1], [0, 0, 1, 1], [], []>} : vector<64x64xbf16>, vector<64x64xbf16>, vector<64x64xf32> -> vector<64x64xf32>
    %c2 = arith.constant 2 : index
    %c0_18 = arith.constant 0 : index
    %41 = vector.load %arg4[%c2, %c0_18] : memref<24x64xf32, #tpu.memory_space<vmem>>, vector<1x64xf32>
    %42 = vector.broadcast %41 : vector<1x64xf32> to vector<64x64xf32>
    %43 = arith.addf %40, %42 : vector<64x64xf32>
    %cst_19 = arith.constant 0.000000e+00 : f32
    %44 = vector.broadcast %cst_19 : f32 to vector<64x64xf32>
    %45 = arith.cmpf oge, %43, %44 : vector<64x64xf32>
    %cst_20 = arith.constant 0.00999999977 : f32
    %46 = vector.broadcast %cst_20 : f32 to vector<64x64xf32>
    %47 = arith.mulf %46, %43 : vector<64x64xf32>
    %48 = arith.select %45, %43, %47 : vector<64x64xi1>, vector<64x64xf32>
    %cst_21 = arith.constant dense<0.000000e+00> : vector<64xf32>
    %49 = vector.multi_reduction <add>, %2, %cst_21 [1] : vector<64x4xf32> to vector<64xf32>
    %50 = vector.shape_cast %49 : vector<64xf32> to vector<64x1xf32>
    %cst_22 = arith.constant 4.000000e+00 : f32
    %51 = vector.broadcast %cst_22 : f32 to vector<64x1xf32>
    %52 = arith.divf %50, %51 : vector<64x1xf32>
    %53 = vector.broadcast %52 : vector<64x1xf32> to vector<64x4xf32>
    %54 = arith.subf %2, %53 : vector<64x4xf32>
    %55 = arith.mulf %54, %54 : vector<64x4xf32>
    %cst_23 = arith.constant dense<0.000000e+00> : vector<64xf32>
    %56 = vector.multi_reduction <add>, %55, %cst_23 [1] : vector<64x4xf32> to vector<64xf32>
    %57 = vector.shape_cast %56 : vector<64xf32> to vector<64x1xf32>
    %cst_24 = arith.constant 4.000000e+00 : f32
    %58 = vector.broadcast %cst_24 : f32 to vector<64x1xf32>
    %59 = arith.divf %57, %58 : vector<64x1xf32>
    %60 = vector.broadcast %52 : vector<64x1xf32> to vector<64x4xf32>
    %61 = arith.subf %2, %60 : vector<64x4xf32>
    %cst_25 = arith.constant 9.99999974E-6 : f32
    %62 = vector.broadcast %cst_25 : f32 to vector<64x1xf32>
    %63 = arith.addf %59, %62 : vector<64x1xf32>
    %64 = math.rsqrt %63 : vector<64x1xf32>
    %65 = vector.broadcast %64 : vector<64x1xf32> to vector<64x4xf32>
    %66 = arith.mulf %61, %65 : vector<64x4xf32>
    %67 = vector.extract_strided_slice %66 {offsets = [0, 0], sizes = [64, 1], strides = [1, 1]} : vector<64x4xf32> to vector<64x1xf32>
    %c8 = arith.constant 8 : index
    %c0_26 = arith.constant 0 : index
    %68 = vector.load %arg4[%c8, %c0_26] : memref<24x64xf32, #tpu.memory_space<vmem>>, vector<1x4xf32>
    %69 = vector.broadcast %67 : vector<64x1xf32> to vector<64x4xf32>
    %70 = vector.broadcast %68 : vector<1x4xf32> to vector<64x4xf32>
    %71 = arith.mulf %69, %70 : vector<64x4xf32>
    %72 = vector.extract_strided_slice %66 {offsets = [0, 1], sizes = [64, 1], strides = [1, 1]} : vector<64x4xf32> to vector<64x1xf32>
    %c9 = arith.constant 9 : index
    %c0_27 = arith.constant 0 : index
    %73 = vector.load %arg4[%c9, %c0_27] : memref<24x64xf32, #tpu.memory_space<vmem>>, vector<1x4xf32>
    %74 = vector.broadcast %72 : vector<64x1xf32> to vector<64x4xf32>
    %75 = vector.broadcast %73 : vector<1x4xf32> to vector<64x4xf32>
    %76 = arith.mulf %74, %75 : vector<64x4xf32>
    %77 = arith.addf %71, %76 : vector<64x4xf32>
    %78 = vector.extract_strided_slice %66 {offsets = [0, 2], sizes = [64, 1], strides = [1, 1]} : vector<64x4xf32> to vector<64x1xf32>
    %c10 = arith.constant 10 : index
    %c0_28 = arith.constant 0 : index
    %79 = vector.load %arg4[%c10, %c0_28] : memref<24x64xf32, #tpu.memory_space<vmem>>, vector<1x4xf32>
    %80 = vector.broadcast %78 : vector<64x1xf32> to vector<64x4xf32>
    %81 = vector.broadcast %79 : vector<1x4xf32> to vector<64x4xf32>
    %82 = arith.mulf %80, %81 : vector<64x4xf32>
    %83 = arith.addf %77, %82 : vector<64x4xf32>
    %84 = vector.extract_strided_slice %66 {offsets = [0, 3], sizes = [64, 1], strides = [1, 1]} : vector<64x4xf32> to vector<64x1xf32>
    %c11 = arith.constant 11 : index
    %c0_29 = arith.constant 0 : index
    %85 = vector.load %arg4[%c11, %c0_29] : memref<24x64xf32, #tpu.memory_space<vmem>>, vector<1x4xf32>
    %86 = vector.broadcast %84 : vector<64x1xf32> to vector<64x4xf32>
    %87 = vector.broadcast %85 : vector<1x4xf32> to vector<64x4xf32>
    %88 = arith.mulf %86, %87 : vector<64x4xf32>
    %89 = arith.addf %83, %88 : vector<64x4xf32>
    %c3 = arith.constant 3 : index
    %c0_30 = arith.constant 0 : index
    %90 = vector.load %arg4[%c3, %c0_30] : memref<24x64xf32, #tpu.memory_space<vmem>>, vector<1x4xf32>
    %91 = vector.broadcast %90 : vector<1x4xf32> to vector<64x4xf32>
    %92 = arith.addf %89, %91 : vector<64x4xf32>
    %cst_31 = arith.constant 0.000000e+00 : f32
    %93 = vector.broadcast %cst_31 : f32 to vector<64x4xf32>
    %94 = arith.cmpf oge, %92, %93 : vector<64x4xf32>
    %cst_32 = arith.constant 0.00999999977 : f32
    %95 = vector.broadcast %cst_32 : f32 to vector<64x4xf32>
    %96 = arith.mulf %95, %92 : vector<64x4xf32>
    %97 = arith.select %94, %92, %96 : vector<64x4xi1>, vector<64x4xf32>
    %98 = vector.extract_strided_slice %97 {offsets = [0, 0], sizes = [64, 1], strides = [1, 1]} : vector<64x4xf32> to vector<64x1xf32>
    %c12 = arith.constant 12 : index
    %c0_33 = arith.constant 0 : index
    %99 = vector.load %arg4[%c12, %c0_33] : memref<24x64xf32, #tpu.memory_space<vmem>>, vector<1x4xf32>
    %100 = vector.broadcast %98 : vector<64x1xf32> to vector<64x4xf32>
    %101 = vector.broadcast %99 : vector<1x4xf32> to vector<64x4xf32>
    %102 = arith.mulf %100, %101 : vector<64x4xf32>
    %103 = vector.extract_strided_slice %97 {offsets = [0, 1], sizes = [64, 1], strides = [1, 1]} : vector<64x4xf32> to vector<64x1xf32>
    %c13 = arith.constant 13 : index
    %c0_34 = arith.constant 0 : index
    %104 = vector.load %arg4[%c13, %c0_34] : memref<24x64xf32, #tpu.memory_space<vmem>>, vector<1x4xf32>
    %105 = vector.broadcast %103 : vector<64x1xf32> to vector<64x4xf32>
    %106 = vector.broadcast %104 : vector<1x4xf32> to vector<64x4xf32>
    %107 = arith.mulf %105, %106 : vector<64x4xf32>
    %108 = arith.addf %102, %107 : vector<64x4xf32>
    %109 = vector.extract_strided_slice %97 {offsets = [0, 2], sizes = [64, 1], strides = [1, 1]} : vector<64x4xf32> to vector<64x1xf32>
    %c14 = arith.constant 14 : index
    %c0_35 = arith.constant 0 : index
    %110 = vector.load %arg4[%c14, %c0_35] : memref<24x64xf32, #tpu.memory_space<vmem>>, vector<1x4xf32>
    %111 = vector.broadcast %109 : vector<64x1xf32> to vector<64x4xf32>
    %112 = vector.broadcast %110 : vector<1x4xf32> to vector<64x4xf32>
    %113 = arith.mulf %111, %112 : vector<64x4xf32>
    %114 = arith.addf %108, %113 : vector<64x4xf32>
    %115 = vector.extract_strided_slice %97 {offsets = [0, 3], sizes = [64, 1], strides = [1, 1]} : vector<64x4xf32> to vector<64x1xf32>
    %c15 = arith.constant 15 : index
    %c0_36 = arith.constant 0 : index
    %116 = vector.load %arg4[%c15, %c0_36] : memref<24x64xf32, #tpu.memory_space<vmem>>, vector<1x4xf32>
    %117 = vector.broadcast %115 : vector<64x1xf32> to vector<64x4xf32>
    %118 = vector.broadcast %116 : vector<1x4xf32> to vector<64x4xf32>
    %119 = arith.mulf %117, %118 : vector<64x4xf32>
    %120 = arith.addf %114, %119 : vector<64x4xf32>
    %c4 = arith.constant 4 : index
    %c0_37 = arith.constant 0 : index
    %121 = vector.load %arg4[%c4, %c0_37] : memref<24x64xf32, #tpu.memory_space<vmem>>, vector<1x4xf32>
    %122 = vector.broadcast %121 : vector<1x4xf32> to vector<64x4xf32>
    %123 = arith.addf %120, %122 : vector<64x4xf32>
    %c16 = arith.constant 16 : index
    %c0_38 = arith.constant 0 : index
    %124 = vector.load %arg3[%c16, %c0_38] : memref<144x32xbf16, #tpu.memory_space<vmem>>, vector<64x32xbf16>
    %125 = arith.truncf %48 : vector<64x64xf32> to vector<64x64xbf16>
    %cst_39 = arith.constant dense<0.000000e+00> : vector<64x32xf32>
    %126 = tpu.matmul %125, %124, %cst_39 {dimension_numbers = #tpu.dot_dimension_numbers<[1], [0], [0], [1], [0, 0, 1, 1], [], []>} : vector<64x64xbf16>, vector<64x32xbf16>, vector<64x32xf32> -> vector<64x32xf32>
    %127 = vector.extract_strided_slice %123 {offsets = [0, 0], sizes = [64, 1], strides = [1, 1]} : vector<64x4xf32> to vector<64x1xf32>
    %c16_40 = arith.constant 16 : index
    %c0_41 = arith.constant 0 : index
    %128 = vector.load %arg4[%c16_40, %c0_41] : memref<24x64xf32, #tpu.memory_space<vmem>>, vector<1x32xf32>
    %129 = vector.broadcast %127 : vector<64x1xf32> to vector<64x32xf32>
    %130 = vector.broadcast %128 : vector<1x32xf32> to vector<64x32xf32>
    %131 = arith.mulf %129, %130 : vector<64x32xf32>
    %132 = vector.extract_strided_slice %123 {offsets = [0, 1], sizes = [64, 1], strides = [1, 1]} : vector<64x4xf32> to vector<64x1xf32>
    %c17 = arith.constant 17 : index
    %c0_42 = arith.constant 0 : index
    %133 = vector.load %arg4[%c17, %c0_42] : memref<24x64xf32, #tpu.memory_space<vmem>>, vector<1x32xf32>
    %134 = vector.broadcast %132 : vector<64x1xf32> to vector<64x32xf32>
    %135 = vector.broadcast %133 : vector<1x32xf32> to vector<64x32xf32>
    %136 = arith.mulf %134, %135 : vector<64x32xf32>
    %137 = arith.addf %131, %136 : vector<64x32xf32>
    %138 = vector.extract_strided_slice %123 {offsets = [0, 2], sizes = [64, 1], strides = [1, 1]} : vector<64x4xf32> to vector<64x1xf32>
    %c18 = arith.constant 18 : index
    %c0_43 = arith.constant 0 : index
    %139 = vector.load %arg4[%c18, %c0_43] : memref<24x64xf32, #tpu.memory_space<vmem>>, vector<1x32xf32>
    %140 = vector.broadcast %138 : vector<64x1xf32> to vector<64x32xf32>
    %141 = vector.broadcast %139 : vector<1x32xf32> to vector<64x32xf32>
    %142 = arith.mulf %140, %141 : vector<64x32xf32>
    %143 = arith.addf %137, %142 : vector<64x32xf32>
    %144 = vector.extract_strided_slice %123 {offsets = [0, 3], sizes = [64, 1], strides = [1, 1]} : vector<64x4xf32> to vector<64x1xf32>
    %c19 = arith.constant 19 : index
    %c0_44 = arith.constant 0 : index
    %145 = vector.load %arg4[%c19, %c0_44] : memref<24x64xf32, #tpu.memory_space<vmem>>, vector<1x32xf32>
    %146 = vector.broadcast %144 : vector<64x1xf32> to vector<64x32xf32>
    %147 = vector.broadcast %145 : vector<1x32xf32> to vector<64x32xf32>
    %148 = arith.mulf %146, %147 : vector<64x32xf32>
    %149 = arith.addf %143, %148 : vector<64x32xf32>
    %150 = arith.addf %126, %149 : vector<64x32xf32>
    %c5 = arith.constant 5 : index
    %c0_45 = arith.constant 0 : index
    %151 = vector.load %arg4[%c5, %c0_45] : memref<24x64xf32, #tpu.memory_space<vmem>>, vector<1x32xf32>
    %152 = vector.broadcast %151 : vector<1x32xf32> to vector<64x32xf32>
    %153 = arith.addf %150, %152 : vector<64x32xf32>
    %cst_46 = arith.constant 0.000000e+00 : f32
    %154 = vector.broadcast %cst_46 : f32 to vector<64x32xf32>
    %155 = arith.cmpf oge, %153, %154 : vector<64x32xf32>
    %cst_47 = arith.constant 0.00999999977 : f32
    %156 = vector.broadcast %cst_47 : f32 to vector<64x32xf32>
    %157 = arith.mulf %156, %153 : vector<64x32xf32>
    %158 = arith.select %155, %153, %157 : vector<64x32xi1>, vector<64x32xf32>
    %c80 = arith.constant 80 : index
    %c0_48 = arith.constant 0 : index
    %159 = vector.load %arg3[%c80, %c0_48] : memref<144x32xbf16, #tpu.memory_space<vmem>>, vector<32x32xbf16>
    %160 = arith.truncf %158 : vector<64x32xf32> to vector<64x32xbf16>
    %cst_49 = arith.constant dense<0.000000e+00> : vector<64x32xf32>
    %161 = tpu.matmul %160, %159, %cst_49 {dimension_numbers = #tpu.dot_dimension_numbers<[1], [0], [0], [1], [0, 0, 1, 1], [], []>} : vector<64x32xbf16>, vector<32x32xbf16>, vector<64x32xf32> -> vector<64x32xf32>
    %c6 = arith.constant 6 : index
    %c0_50 = arith.constant 0 : index
    %162 = vector.load %arg4[%c6, %c0_50] : memref<24x64xf32, #tpu.memory_space<vmem>>, vector<1x32xf32>
    %163 = vector.broadcast %162 : vector<1x32xf32> to vector<64x32xf32>
    %164 = arith.addf %161, %163 : vector<64x32xf32>
    %cst_51 = arith.constant 0.000000e+00 : f32
    %165 = vector.broadcast %cst_51 : f32 to vector<64x32xf32>
    %166 = arith.cmpf oge, %164, %165 : vector<64x32xf32>
    %cst_52 = arith.constant 0.00999999977 : f32
    %167 = vector.broadcast %cst_52 : f32 to vector<64x32xf32>
    %168 = arith.mulf %167, %164 : vector<64x32xf32>
    %169 = arith.select %166, %164, %168 : vector<64x32xi1>, vector<64x32xf32>
    %c112 = arith.constant 112 : index
    %c0_53 = arith.constant 0 : index
    %170 = vector.load %arg3[%c112, %c0_53] : memref<144x32xbf16, #tpu.memory_space<vmem>>, vector<32x32xbf16>
    %171 = arith.truncf %169 : vector<64x32xf32> to vector<64x32xbf16>
    %cst_54 = arith.constant dense<0.000000e+00> : vector<64x32xf32>
    %172 = tpu.matmul %171, %170, %cst_54 {dimension_numbers = #tpu.dot_dimension_numbers<[1], [0], [0], [1], [0, 0, 1, 1], [], []>} : vector<64x32xbf16>, vector<32x32xbf16>, vector<64x32xf32> -> vector<64x32xf32>
    %c7 = arith.constant 7 : index
    %c0_55 = arith.constant 0 : index
    %173 = vector.load %arg4[%c7, %c0_55] : memref<24x64xf32, #tpu.memory_space<vmem>>, vector<1x32xf32>
    %174 = vector.broadcast %173 : vector<1x32xf32> to vector<64x32xf32>
    %175 = arith.addf %172, %174 : vector<64x32xf32>
    %c0_56 = arith.constant 0 : index
    %c0_57 = arith.constant 0 : index
    %176 = vector.load %arg5[%c0_56, %c0_57] : memref<64x32xf32, #tpu.memory_space<vmem>>, vector<64x32xf32>
    tpu.vector_store %arg5[%c0_56, %c0_57], %175 {strides = array<i32>} : memref<64x32xf32, #tpu.memory_space<vmem>>, vector<64x32xf32>,
    return
  }
  func.func @transform_0(%arg0: i32) -> (i32, i32) {
    %c0_i32 = arith.constant 0 : i32
    %c0_i32_0 = arith.constant 0 : i32
    return %arg0, %c0_i32 : i32, i32
  }
  func.func @transform_1(%arg0: i32) -> (i32, i32) {
    %c0_i32 = arith.constant 0 : i32
    %c0_i32_0 = arith.constant 0 : i32
    %c0_i32_1 = arith.constant 0 : i32
    return %c0_i32, %c0_i32_0 : i32, i32
  }
  func.func @transform_2(%arg0: i32) -> (i32, i32) {
    %c0_i32 = arith.constant 0 : i32
    %c0_i32_0 = arith.constant 0 : i32
    %c0_i32_1 = arith.constant 0 : i32
    return %c0_i32, %c0_i32_0 : i32, i32
  }
  func.func @transform_3(%arg0: i32) -> (i32, i32) {
    %c0_i32 = arith.constant 0 : i32
    %c0_i32_0 = arith.constant 0 : i32
    %c0_i32_1 = arith.constant 0 : i32
    return %c0_i32, %c0_i32_0 : i32, i32
  }
  func.func @transform_4(%arg0: i32) -> (i32, i32) {
    %c0_i32 = arith.constant 0 : i32
    %c0_i32_0 = arith.constant 0 : i32
    return %arg0, %c0_i32 : i32, i32
  }
}

</mosaic_0001>

<llo_original>
// kernel: item_encoder_forward.1
$region0: #{item_encoder_forward.1}
  #allocation0 [shape = 'u32[]', space=smem, size = 0x4, offset = 0x4, fixed_abs, tag = 'smem constant byte address 0x4 - core index']
  #allocation1 [shape = 'u32[72,128]{1,0:T(1,128)}', space=vmem, size = 0x9000, scoped, tag = 'internal scratch']
  %s0 = inlined_call_operand.vmem [shape: f32[256,12], index: 0, kind: input, shape index: {}]
  %s1 = inlined_call_operand.vmem [shape: bf16[96,64], index: 1, kind: input, shape index: {}]
  %s2 = inlined_call_operand.vmem [shape: bf16[144,32], index: 2, kind: input, shape index: {}]
  %s3 = inlined_call_operand.vmem [shape: f32[24,64], index: 3, kind: input, shape index: {}]
  %s4 = inlined_call_operand.vmem [shape: f32[256,32], index: 4, kind: output, shape index: {}]
  %s5 = sld [smem:[#allocation0]]
  $region49: #{item_encoder_forward.1} parent=0
    _
  %s7 = ssub.s32 1, %s5
  %s8 = scalar_select 0, %s7, %s5
  loop: start=0, step=1, limit=6
  $region2: #{item_encoder_forward.1} parent=0 // loop_pre_header
    _
  $region3: #{item_encoder_forward.1} parent=0 // loop_header
    %s10 = sphi 0, %s14
    %p11 = scmp.ge.s32.totalorder %s10, 6
    %s20 = sphi 0, %s22
    %s23 = sphi 0, %s20
    %s24 = sphi 0, %s23
    %s40 = sphi 0, %s24
    %s44 = sphi 0, %s44
    %s46 = sphi 0, %s44
    %s47 = sphi 0, %s46
    %s61 = sphi 0, %s47
    %s65 = sphi 0, %s65
    %s67 = sphi 0, %s65
    %s68 = sphi 0, %s67
    %s82 = sphi 0, %s68
    %s86 = sphi 0, %s86
    %s88 = sphi 0, %s86
    %s89 = sphi 0, %s88
    %s103 = sphi 0, %s89
    %s109 = sphi 0, %s111
    %s112 = sphi 0, %s109
    %s113 = sphi 0, %s112
    %s129 = sphi 0, %s113
  $region4: #{item_encoder_forward.1} parent=0 // loop_header_branch
    %13 = sbr.rel (%p11) target = $region8
  $region5: #{item_encoder_forward.1} parent=0 // loop_body
    %s15 = ssub.s32 %s10, 1
    %s16 = ssub.s32 %s10, 2
    %s17 = sadd.s32 %s10, 1
    %s18 = ssub.s32 %s10, %s17
    %p19 = scmp.eq.s32.totalorder %s18, 0
    %s21 = sadd.s32 %s20, 1
    %s22 = scalar_select %p19, %s20, %s21
    %p25 = pneg %p19
    %p26 = scmp.eq.s32.totalorder %s10, 3
    %p27 = por %p25, %p26
    %p28 = scmp.ne.s32.totalorder %s20, %s23
    %p29 = scmp.eq.s32.totalorder %s10, 0
    %p30 = por %p28, %p29
    %p31 = scmp.ne.s32.totalorder %s20, %s23
    %p32 = scmp.eq.s32.totalorder %s15, 3
    %p33 = por %p31, %p32
    %p34 = scmp.ne.s32.totalorder %s23, %s24
    %p35 = scmp.eq.s32.totalorder %s15, 0
    %p36 = por %p34, %p35
    %p37 = scmp.ne.s32.totalorder %s23, %s24
    %p38 = scmp.eq.s32.totalorder %s16, 3
    %p39 = por %p37, %p38
    %p41 = scmp.ne.s32.totalorder %s24, %s40
    %p42 = scmp.eq.s32.totalorder %s16, 0
    %p43 = por %p41, %p42
    %s45 = sadd.s32 %s44, 1
    %p48 = scmp.eq.s32.totalorder %s10, 3
    %p49 = scmp.ne.s32.totalorder %s44, %s46
    %p50 = scmp.eq.s32.totalorder %s10, 0
    %p51 = por %p49, %p50
    %p52 = scmp.ne.s32.totalorder %s44, %s46
    %p53 = scmp.eq.s32.totalorder %s15, 3
    %p54 = por %p52, %p53
    %p55 = scmp.ne.s32.totalorder %s46, %s47
    %p56 = scmp.eq.s32.totalorder %s15, 0
    %p57 = por %p55, %p56
    %p58 = scmp.ne.s32.totalorder %s46, %s47
    %p59 = scmp.eq.s32.totalorder %s16, 3
    %p60 = por %p58, %p59
    %p62 = scmp.ne.s32.totalorder %s47, %s61
    %p63 = scmp.eq.s32.totalorder %s16, 0
    %p64 = por %p62, %p63
    %s66 = sadd.s32 %s65, 1
    %p69 = scmp.eq.s32.totalorder %s10, 3
    %p70 = scmp.ne.s32.totalorder %s65, %s67
    %p71 = scmp.eq.s32.totalorder %s10, 0
    %p72 = por %p70, %p71
    %p73 = scmp.ne.s32.totalorder %s65, %s67
    %p74 = scmp.eq.s32.totalorder %s15, 3
    %p75 = por %p73, %p74
    %p76 = scmp.ne.s32.totalorder %s67, %s68
    %p77 = scmp.eq.s32.totalorder %s15, 0
    %p78 = por %p76, %p77
    %p79 = scmp.ne.s32.totalorder %s67, %s68
    %p80 = scmp.eq.s32.totalorder %s16, 3
    %p81 = por %p79, %p80
    %p83 = scmp.ne.s32.totalorder %s68, %s82
    %p84 = scmp.eq.s32.totalorder %s16, 0
    %p85 = por %p83, %p84
    %s87 = sadd.s32 %s86, 1
    %p90 = scmp.eq.s32.totalorder %s10, 3
    %p91 = scmp.ne.s32.totalorder %s86, %s88
    %p92 = scmp.eq.s32.totalorder %s10, 0
    %p93 = por %p91, %p92
    %p94 = scmp.ne.s32.totalorder %s86, %s88
    %p95 = scmp.eq.s32.totalorder %s15, 3
    %p96 = por %p94, %p95
    %p97 = scmp.ne.s32.totalorder %s88, %s89
    %p98 = scmp.eq.s32.totalorder %s15, 0
    %p99 = por %p97, %p98
    %p100 = scmp.ne.s32.totalorder %s88, %s89
    %p101 = scmp.eq.s32.totalorder %s16, 3
    %p102 = por %p100, %p101
    %p104 = scmp.ne.s32.totalorder %s89, %s103
    %p105 = scmp.eq.s32.totalorder %s16, 0
    %p106 = por %p104, %p105
    %s107 = ssub.s32 %s10, %s17
    %p108 = scmp.eq.s32.totalorder %s107, 0
    %s110 = sadd.s32 %s109, 1
    %s111 = scalar_select %p108, %s109, %s110
    %p114 = pneg %p108
    %p115 = scmp.eq.s32.totalorder %s10, 3
    %p116 = por %p114, %p115
    %p117 = scmp.ne.s32.totalorder %s109, %s112
    %p118 = scmp.eq.s32.totalorder %s10, 0
    %p119 = por %p117, %p118
    %p120 = scmp.ne.s32.totalorder %s109, %s112
    %p121 = scmp.eq.s32.totalorder %s15, 3
    %p122 = por %p120, %p121
    %p123 = scmp.ne.s32.totalorder %s112, %s113
    %p124 = scmp.eq.s32.totalorder %s15, 0
    %p125 = por %p123, %p124
    %p126 = scmp.ne.s32.totalorder %s112, %s113
    %p127 = scmp.eq.s32.totalorder %s16, 3
    %p128 = por %p126, %p127
    %p130 = scmp.ne.s32.totalorder %s113, %s129
    %p131 = scmp.eq.s32.totalorder %s16, 0
    %p132 = por %p130, %p131
    %p133 = scmp.le.s32.totalorder 1, %s10
    %p134 = scmp.lt.s32.totalorder %s10, 5
    %p135 = pnand %p133, %p134
    %p136 = pneg %p135
    // Predicated region
    $region9: #{item_encoder_forward.1} parent=5 // pred_check
      _
    $region10: #{item_encoder_forward.1} parent=5 // pred_check_branch
      %138 = sbr.rel (%p135) target = $region12
    $region11: #{item_encoder_forward.1} parent=5 // pred_region
      %s139 = ssub.s32 %s10, 1
      // Predicated region
      $region13: #{item_encoder_forward.1} parent=11 // pred_check
        %p140 = pneg %p57
      $region14: #{item_encoder_forward.1} parent=11 // pred_check_branch
        %142 = sbr.rel (%p140) target = $region16
      $region15: #{item_encoder_forward.1} parent=11 // pred_region
        _
      $region16: #{item_encoder_forward.1} parent=11 // pred_fallthru
        _
      // Predicated region
      $region17: #{item_encoder_forward.1} parent=11 // pred_check
        %p143 = pneg %p78
      $region18: #{item_encoder_forward.1} parent=11 // pred_check_branch
        %145 = sbr.rel (%p143) target = $region20
      $region19: #{item_encoder_forward.1} parent=11 // pred_region
        _
      $region20: #{item_encoder_forward.1} parent=11 // pred_fallthru
        _
      // Predicated region
      $region21: #{item_encoder_forward.1} parent=11 // pred_check
        %p146 = pneg %p99
      $region22: #{item_encoder_forward.1} parent=11 // pred_check_branch
        %148 = sbr.rel (%p146) target = $region24
      $region23: #{item_encoder_forward.1} parent=11 // pred_region
        _
      $region24: #{item_encoder_forward.1} parent=11 // pred_fallthru
        _
    $region12: #{item_encoder_forward.1} parent=5 // pred_fallthru
      _
    %p149 = scmp.lt.s32.totalorder %s10, 4
    // Predicated region
    $region25: #{item_encoder_forward.1} parent=5 // pred_check
      %p150 = pneg %p149
    $region26: #{item_encoder_forward.1} parent=5 // pred_check_branch
      %152 = sbr.rel (%p150) target = $region28
    $region27: #{item_encoder_forward.1} parent=5 // pred_region
      // Predicated region
      $region29: #{item_encoder_forward.1} parent=27 // pred_check
        %p153 = pneg %p30
      $region30: #{item_encoder_forward.1} parent=27 // pred_check_branch
        %155 = sbr.rel (%p153) target = $region32
      $region31: #{item_encoder_forward.1} parent=27 // pred_region
        %s156 = smul.u32 8, %s10
        %p157 = scmp.lt.s32.totalorder %s156, 31
        %s158 = scalar_select %p157, %s156, 31
        %s159 = smul.addr %s158, 8
        %s160 = scalar_lea.vmem %s0, %s159
        %s161 = smul.u32 8, %s10
      $region32: #{item_encoder_forward.1} parent=27 // pred_fallthru
        _
    $region28: #{item_encoder_forward.1} parent=5 // pred_fallthru
      _
    %p162 = scmp.le.s32.totalorder 1, %s10
    %p163 = scmp.lt.s32.totalorder %s10, 5
    %p164 = pnand %p162, %p163
    %p165 = pneg %p164
    // Predicated region
    $region33: #{item_encoder_forward.1} parent=5 // pred_check
      _
    $region34: #{item_encoder_forward.1} parent=5 // pred_check_branch
      %167 = sbr.rel (%p164) target = $region36
    $region35: #{item_encoder_forward.1} parent=5 // pred_region
      %s168 = ssub.s32 %s10, 1
      %s169 = smul.u32 8, %s15
      %p170 = scmp.lt.s32.totalorder %s169, 31
      %s171 = scalar_select %p170, %s169, 31
      %s172 = smul.addr %s171, 8
      %s173 = scalar_lea.vmem %s0, %s172
      %p174 = pneg %p36
      %p175 = pneg %p33
      %p176 = pneg %p57
      %p177 = pneg %p54
      %p178 = pneg %p78
      %p179 = pneg %p75
      %p180 = pneg %p99
      %p181 = pneg %p96
      %p182 = pneg %p125
      %p183 = pneg %p122
      %s184 = smul.u32 8, %s15
      %p185 = scmp.lt.s32.totalorder %s184, 31
      %s186 = scalar_select %p185, %s184, 31
      %s187 = smul.addr %s186, 8
      %s188 = scalar_lea.vmem %s4, %s187
      %s189 = smul.u32 8, %s15
      %p190 = scmp.lt.s32.totalorder %s189, 31
      %s191 = scalar_select %p190, %s189, 31
      %s192 = smul.addr %s191, 8
      %s193 = scalar_lea.vmem %s0, %s192
      %s194 = smul.u32 8, %s15
      %s195 = smul.u32 8, %s15
      %p196 = scmp.lt.s32.totalorder %s195, 31
      %s197 = scalar_select %p196, %s195, 31
      %s198 = smul.addr %s197, 8
      %s199 = scalar_lea.vmem %s4, %s198
      %s200 = smul.u32 8, %s15
      %v202 = vld [vmem:[%s193] sm:$0xff]
      %v203 = vld [vmem:[%s193 + $0x8] sm:$0xff]
      %v204 = vld [vmem:[%s193 + $0x10] sm:$0xff]
      %v205 = vld [vmem:[%s193 + $0x18] sm:$0xff]
      %v206 = vld [vmem:[%s193 + $0x20] sm:$0xff]
      %v207 = vld [vmem:[%s193 + $0x28] sm:$0xff]
      %v208 = vld [vmem:[%s193 + $0x30] sm:$0xff]
      %v209 = vld [vmem:[%s193 + $0x38] sm:$0xff]
      %v210 = vld [vmem:[%s2] sm:$0xf]
      %v211 = vpack.c.bf16 %v203, %v202
      %v212 = vpack.c.bf16 %v205, %v204
      %v213 = vpack.c.bf16 %v207, %v206
      %v214 = vpack.c.bf16 %v209, %v208
      %v215 = vld [vmem:[%s3] sm:$0x1]
      %v216 = vperm.slane %v215, 0
      %vm217 = vcmask 64512
      %v219 = vsel %vm217, %v211, 0
      %v222 = vsel %vm217, %v212, 0
      %v225 = vsel %vm217, %v213, 0
      %v228 = vsel %vm217, %v214, 0
      %vm230 = vcmask 1043456
      %v232 = vsel %vm230, %v210, 0
      %234 = vmatpush.bf16.msra.mxu0 0
      %235 = vmatpush.bf16.msra.mxu0 0
      %236 = vmatpush.bf16.msra.mxu0 0
      %237 = vmatpush.bf16.msra.mxu0 0
      %238 = vmatpush.bf16.msra.mxu0 0
      %239 = vmatpush.bf16.msra.mxu0 0
      %240 = vmatpush.bf16.msra.mxu0 0
      %241 = vmatpush.bf16.msra.mxu0 %v232
      %242 = vmatmul.bf16.gmra.mxu0 %v219
      %v243 = vpop.f32.mrf.mxu0
      %v244 = vadd.f32 %v216, %v243
      %v245 = vpop.f32.mrf.mxu0
      %v246 = vadd.f32 %v216, %v245
      %247 = vmatmul.bf16.gmra.mxu0 %v222
      %v248 = vpop.f32.mrf.mxu0
      %v249 = vadd.f32 %v216, %v248
      %v250 = vpop.f32.mrf.mxu0
      %v251 = vadd.f32 %v216, %v250
      %252 = vmatmul.bf16.gmra.mxu0 %v225
      %v253 = vpop.f32.mrf.mxu0
      %v254 = vadd.f32 %v216, %v253
      %v255 = vpop.f32.mrf.mxu0
      %v256 = vadd.f32 %v216, %v255
      %257 = vmatmul.bf16.gmra.mxu0 %v228
      %v258 = vpop.f32.mrf.mxu0
      %v259 = vadd.f32 %v216, %v258
      %v260 = vpop.f32.mrf.mxu0
      %v261 = vadd.f32 %v216, %v260
      %262 = vdwg.mxu0
      %vm263 = vcmask 261120
      %v264 = vsel %vm263, %v244, 0.0
      %265 = vadd.xlane.f32.xlu0 %v264
      %v266 = vpop.xlane.xlu0 %265
      %v267 = vsel %vm263, %v246, 0.0
      %268 = vadd.xlane.f32.xlu0 %v267
      %v269 = vpop.xlane.xlu0 %268
      %v270 = vsel %vm263, %v249, 0.0
      %271 = vadd.xlane.f32.xlu0 %v270
      %v272 = vpop.xlane.xlu0 %271
      %v273 = vsel %vm263, %v251, 0.0
      %274 = vadd.xlane.f32.xlu0 %v273
      %v275 = vpop.xlane.xlu0 %274
      %v276 = vsel %vm263, %v254, 0.0
      %277 = vadd.xlane.f32.xlu0 %v276
      %v278 = vpop.xlane.xlu0 %277
      %v279 = vsel %vm263, %v256, 0.0
      %280 = vadd.xlane.f32.xlu0 %v279
      %v281 = vpop.xlane.xlu0 %280
      %v282 = vsel %vm263, %v259, 0.0
      %283 = vadd.xlane.f32.xlu0 %v282
      %v284 = vpop.xlane.xlu0 %283
      %v285 = vsel %vm263, %v261, 0.0
      %286 = vadd.xlane.f32.xlu0 %v285
      %v287 = vpop.xlane.xlu0 %286
      %v288 = vrcp.pop 32.0
      %v289 = vmul.f32 32.0, %v288
      %v290 = vsub.f32 1.0, %v289
      %v291 = vmul.f32 %v288, %v290
      %v292 = vadd.f32 %v288, %v291
      %vm293 = vweird.f32 %v288
      %v294 = vsel %vm293, %v288, %v292
      %v295 = vmul.f32 %v266, %v294
      %v296 = vmul.f32 %v269, %v294
      %v297 = vmul.f32 %v272, %v294
      %v298 = vmul.f32 %v275, %v294
      %v299 = vmul.f32 %v278, %v294
      %v300 = vmul.f32 %v281, %v294
      %v301 = vmul.f32 %v284, %v294
      %v302 = vmul.f32 %v287, %v294
      %v303 = vsub.f32 %v244, %v295
      %v304 = vsub.f32 %v246, %v296
      %v305 = vsub.f32 %v249, %v297
      %v306 = vsub.f32 %v251, %v298
      %v307 = vsub.f32 %v254, %v299
      %v308 = vsub.f32 %v256, %v300
      %v309 = vsub.f32 %v259, %v301
      %v310 = vsub.f32 %v261, %v302
      %v311 = vmul.f32 %v303, %v303
      %v312 = vmul.f32 %v304, %v304
      %v313 = vmul.f32 %v305, %v305
      %v314 = vmul.f32 %v306, %v306
      %v315 = vmul.f32 %v307, %v307
      %v316 = vmul.f32 %v308, %v308
      %v317 = vmul.f32 %v309, %v309
      %v318 = vmul.f32 %v310, %v310
      %v319 = vsel %vm263, %v311, 0.0
      %320 = vadd.xlane.f32.xlu0 %v319
      %v321 = vpop.xlane.xlu0 %320
      %v322 = vsel %vm263, %v312, 0.0
      %323 = vadd.xlane.f32.xlu0 %v322
      %v324 = vpop.xlane.xlu0 %323
      %v325 = vsel %vm263, %v313, 0.0
      %326 = vadd.xlane.f32.xlu0 %v325
      %v327 = vpop.xlane.xlu0 %326
      %v328 = vsel %vm263, %v314, 0.0
      %329 = vadd.xlane.f32.xlu0 %v328
      %v330 = vpop.xlane.xlu0 %329
      %v331 = vsel %vm263, %v315, 0.0
      %332 = vadd.xlane.f32.xlu0 %v331
      %v333 = vpop.xlane.xlu0 %332
      %v334 = vsel %vm263, %v316, 0.0
      %335 = vadd.xlane.f32.xlu0 %v334
      %v336 = vpop.xlane.xlu0 %335
      %v337 = vsel %vm263, %v317, 0.0
      %338 = vadd.xlane.f32.xlu0 %v337
      %v339 = vpop.xlane.xlu0 %338
      %v340 = vsel %vm263, %v318, 0.0
      %341 = vadd.xlane.f32.xlu0 %v340
      %v342 = vpop.xlane.xlu0 %341
      %v343 = vmul.f32 %v321, %v294
      %v344 = vmul.f32 %v324, %v294
      %v345 = vmul.f32 %v327, %v294
      %v346 = vmul.f32 %v330, %v294
      %v347 = vmul.f32 %v333, %v294
      %v348 = vmul.f32 %v336, %v294
      %v349 = vmul.f32 %v339, %v294
      %v350 = vmul.f32 %v342, %v294
      %v351 = vadd.f32 %v343, 1e-05
      %v352 = vadd.f32 %v344, 1e-05
      %v353 = vadd.f32 %v345, 1e-05
      %v354 = vadd.f32 %v346, 1e-05
      %v355 = vadd.f32 %v347, 1e-05
      %v356 = vadd.f32 %v348, 1e-05
      %v357 = vadd.f32 %v349, 1e-05
      %v358 = vadd.f32 %v350, 1e-05
      %v359 = vrsqrt.pop %v351
      %v360 = vmul.f32 %v359, %v351
      %v361 = vmul.f32 %v360, %v359
      %v362 = vmul.f32 0.5, %v361
      %v363 = vsub.f32 1.5, %v362
      %v364 = vmul.f32 %v359, %v363
      %vm365 = vweird.f32 %v351
      %vm366 = vweird.f32 %v359
      %vm367 = vmor %vm365, %vm366
      %v368 = vsel %vm367, %v359, %v364
      %v369 = vrsqrt.pop %v352
      %v370 = vmul.f32 %v369, %v352
      %v371 = vmul.f32 %v370, %v369
      %v372 = vmul.f32 0.5, %v371
      %v373 = vsub.f32 1.5, %v372
      %v374 = vmul.f32 %v369, %v373
      %vm375 = vweird.f32 %v352
      %vm376 = vweird.f32 %v369
      %vm377 = vmor %vm375, %vm376
      %v378 = vsel %vm377, %v369, %v374
      %v379 = vrsqrt.pop %v353
      %v380 = vmul.f32 %v379, %v353
      %v381 = vmul.f32 %v380, %v379
      %v382 = vmul.f32 0.5, %v381
      %v383 = vsub.f32 1.5, %v382
      %v384 = vmul.f32 %v379, %v383
      %vm385 = vweird.f32 %v353
      %vm386 = vweird.f32 %v379
      %vm387 = vmor %vm385, %vm386
      %v388 = vsel %vm387, %v379, %v384
      %v389 = vrsqrt.pop %v354
      %v390 = vmul.f32 %v389, %v354
      %v391 = vmul.f32 %v390, %v389
      %v392 = vmul.f32 0.5, %v391
      %v393 = vsub.f32 1.5, %v392
      %v394 = vmul.f32 %v389, %v393
      %vm395 = vweird.f32 %v354
      %vm396 = vweird.f32 %v389
      %vm397 = vmor %vm395, %vm396
      %v398 = vsel %vm397, %v389, %v394
      %v399 = vrsqrt.pop %v355
      %v400 = vmul.f32 %v399, %v355
      %v401 = vmul.f32 %v400, %v399
      %v402 = vmul.f32 0.5, %v401
      %v403 = vsub.f32 1.5, %v402
      %v404 = vmul.f32 %v399, %v403
      %vm405 = vweird.f32 %v355
      %vm406 = vweird.f32 %v399
      %vm407 = vmor %vm405, %vm406
      %v408 = vsel %vm407, %v399, %v404
      %v409 = vrsqrt.pop %v356
      %v410 = vmul.f32 %v409, %v356
      %v411 = vmul.f32 %v410, %v409
      %v412 = vmul.f32 0.5, %v411
      %v413 = vsub.f32 1.5, %v412
      %v414 = vmul.f32 %v409, %v413
      %vm415 = vweird.f32 %v356
      %vm416 = vweird.f32 %v409
      %vm417 = vmor %vm415, %vm416
      %v418 = vsel %vm417, %v409, %v414
      %v419 = vrsqrt.pop %v357
      %v420 = vmul.f32 %v419, %v357
      %v421 = vmul.f32 %v420, %v419
      %v422 = vmul.f32 0.5, %v421
      %v423 = vsub.f32 1.5, %v422
      %v424 = vmul.f32 %v419, %v423
      %vm425 = vweird.f32 %v357
      %vm426 = vweird.f32 %v419
      %vm427 = vmor %vm425, %vm426
      %v428 = vsel %vm427, %v419, %v424
      %v429 = vrsqrt.pop %v358
      %v430 = vmul.f32 %v429, %v358
      %v431 = vmul.f32 %v430, %v429
      %v432 = vmul.f32 0.5, %v431
      %v433 = vsub.f32 1.5, %v432
      %v434 = vmul.f32 %v429, %v433
      %vm435 = vweird.f32 %v358
      %vm436 = vweird.f32 %v429
      %vm437 = vmor %vm435, %vm436
      %v438 = vsel %vm437, %v429, %v434
      %v439 = vmul.f32 %v303, %v368
      %v440 = vmul.f32 %v304, %v378
      %v441 = vmul.f32 %v305, %v388
      %v442 = vmul.f32 %v306, %v398
      %v443 = vmul.f32 %v307, %v408
      %v444 = vmul.f32 %v308, %v418
      %v445 = vmul.f32 %v309, %v428
      %v446 = vmul.f32 %v310, %v438
      %v447 = vld [vmem:[%s1] sm:$0xf]
      %v448 = vld [vmem:[%s1 + $0x4] sm:$0xf]
      %v449 = vld [vmem:[%s1 + $0x8] sm:$0xf]
      %v450 = vld [vmem:[%s1 + $0xc] sm:$0xf]
      %v451 = vpack.c.bf16 %v440, %v439
      %v452 = vpack.c.bf16 %v442, %v441
      %v453 = vpack.c.bf16 %v444, %v443
      %v454 = vpack.c.bf16 %v446, %v445
      %v455 = vld [vmem:[%s3 + $0x1] sm:$0x1]
      %v456 = vperm.slane %v455, 0
      %v461 = vunpack.c.l.b16 %v447
      %v462 = vunpack.c.l.b16 %v448
      %v463 = vunpack.c.l.b16 %v449
      %v464 = vunpack.c.l.b16 %v450
      %v465 = vpack.c.b16 %v462, %v461
      %v466 = vpack.c.b16 %v464, %v463
      %v470 = vsel %vm263, %v451, 0
      %v473 = vsel %vm263, %v452, 0
      %v476 = vsel %vm263, %v453, 0
      %v479 = vsel %vm263, %v454, 0
      %481 = vmatpush.bf16.msra.mxu0 0
      %482 = vmatpush.bf16.msra.mxu0 0
      %483 = vmatpush.bf16.msra.mxu0 0
      %484 = vmatpush.bf16.msra.mxu0 0
      %485 = vmatpush.bf16.msra.mxu0 0
      %486 = vmatpush.bf16.msra.mxu0 0
      %487 = vmatpush.bf16.msra.mxu0 %v466
      %488 = vmatpush.bf16.msra.mxu0 %v465
      %489 = vmatmul.bf16.gmra.mxu0 %v470
      %v490 = vpop.f32.mrf.mxu0
      %v491 = vadd.f32 %v456, %v490
      %v492 = vpop.f32.mrf.mxu0
      %v493 = vadd.f32 %v456, %v492
      %494 = vmatmul.bf16.gmra.mxu0 %v473
      %v495 = vpop.f32.mrf.mxu0
      %v496 = vadd.f32 %v456, %v495
      %v497 = vpop.f32.mrf.mxu0
      %v498 = vadd.f32 %v456, %v497
      %499 = vmatmul.bf16.gmra.mxu0 %v476
      %v500 = vpop.f32.mrf.mxu0
      %v501 = vadd.f32 %v456, %v500
      %v502 = vpop.f32.mrf.mxu0
      %v503 = vadd.f32 %v456, %v502
      %504 = vmatmul.bf16.gmra.mxu0 %v479
      %v505 = vpop.f32.mrf.mxu0
      %v506 = vadd.f32 %v456, %v505
      %v507 = vpop.f32.mrf.mxu0
      %v508 = vadd.f32 %v456, %v507
      %509 = vdwg.mxu0
      %vm510 = vcmp.ge.f32.partialorder %v491, 0.0
      %vm511 = vcmp.ge.f32.partialorder %v493, 0.0
      %vm512 = vcmp.ge.f32.partialorder %v496, 0.0
      %vm513 = vcmp.ge.f32.partialorder %v498, 0.0
      %vm514 = vcmp.ge.f32.partialorder %v501, 0.0
      %vm515 = vcmp.ge.f32.partialorder %v503, 0.0
      %vm516 = vcmp.ge.f32.partialorder %v506, 0.0
      %vm517 = vcmp.ge.f32.partialorder %v508, 0.0
      %v518 = vmul.f32 %v491, 0.01
      %v519 = vmul.f32 %v493, 0.01
      %v520 = vmul.f32 %v496, 0.01
      %v521 = vmul.f32 %v498, 0.01
      %v522 = vmul.f32 %v501, 0.01
      %v523 = vmul.f32 %v503, 0.01
      %v524 = vmul.f32 %v506, 0.01
      %v525 = vmul.f32 %v508, 0.01
      %v526 = vsel %vm510, %v491, %v518
      %v527 = vsel %vm511, %v493, %v519
      %v528 = vsel %vm512, %v496, %v520
      %v529 = vsel %vm513, %v498, %v521
      %v530 = vsel %vm514, %v501, %v522
      %v531 = vsel %vm515, %v503, %v523
      %v532 = vsel %vm516, %v506, %v524
      %v533 = vsel %vm517, %v508, %v525
      %v534 = vld [vmem:[%s1 + $0x10] sm:$0xf]
      %v535 = vld [vmem:[%s1 + $0x14] sm:$0xf]
      %v536 = vld [vmem:[%s1 + $0x18] sm:$0xf]
      %v537 = vld [vmem:[%s1 + $0x1c] sm:$0xf]
      %v538 = vld [vmem:[%s1 + $0x20] sm:$0xf]
      %v539 = vld [vmem:[%s1 + $0x24] sm:$0xf]
      %v540 = vld [vmem:[%s1 + $0x28] sm:$0xf]
      %v541 = vld [vmem:[%s1 + $0x2c] sm:$0xf]
      %v542 = vpack.c.bf16 %v527, %v526
      %v543 = vpack.c.bf16 %v529, %v528
      %v544 = vpack.c.bf16 %v531, %v530
      %v545 = vpack.c.bf16 %v533, %v532
      %v546 = vld [vmem:[%s3 + $0x2] sm:$0x1]
      %v547 = vperm.slane %v546, 0
      %v556 = vunpack.c.l.b16 %v534
      %v557 = vunpack.c.l.b16 %v535
      %v558 = vunpack.c.l.b16 %v536
      %v559 = vunpack.c.l.b16 %v537
      %v560 = vunpack.c.l.b16 %v538
      %v561 = vunpack.c.l.b16 %v539
      %v562 = vunpack.c.l.b16 %v540
      %v563 = vunpack.c.l.b16 %v541
      %v564 = vpack.c.b16 %v557, %v556
      %v565 = vpack.c.b16 %v559, %v558
      %v566 = vpack.c.b16 %v561, %v560
      %v567 = vpack.c.b16 %v563, %v562
      %vm572 = vcmask 523264
      %v574 = vsel %vm572, %v542, 0
      %v577 = vsel %vm572, %v543, 0
      %v580 = vsel %vm572, %v544, 0
      %v583 = vsel %vm572, %v545, 0
      %585 = vmatpush.bf16.msra.mxu0 0
      %586 = vmatpush.bf16.msra.mxu0 0
      %587 = vmatpush.bf16.msra.mxu0 0
      %588 = vmatpush.bf16.msra.mxu0 0
      %589 = vmatpush.bf16.msra.mxu0 %v567
      %590 = vmatpush.bf16.msra.mxu0 %v566
      %591 = vmatpush.bf16.msra.mxu0 %v565
      %592 = vmatpush.bf16.msra.mxu0 %v564
      %593 = vmatmul.bf16.gmra.mxu0 %v574
      %v594 = vpop.f32.mrf.mxu0
      %v595 = vadd.f32 %v547, %v594
      %v596 = vpop.f32.mrf.mxu0
      %v597 = vadd.f32 %v547, %v596
      %598 = vmatmul.bf16.gmra.mxu0 %v577
      %v599 = vpop.f32.mrf.mxu0
      %v600 = vadd.f32 %v547, %v599
      %v601 = vpop.f32.mrf.mxu0
      %v602 = vadd.f32 %v547, %v601
      %603 = vmatmul.bf16.gmra.mxu0 %v580
      %v604 = vpop.f32.mrf.mxu0
      %v605 = vadd.f32 %v547, %v604
      %v606 = vpop.f32.mrf.mxu0
      %v607 = vadd.f32 %v547, %v606
      %608 = vmatmul.bf16.gmra.mxu0 %v583
      %v609 = vpop.f32.mrf.mxu0
      %v610 = vadd.f32 %v547, %v609
      %v611 = vpop.f32.mrf.mxu0
      %v612 = vadd.f32 %v547, %v611
      %613 = vdwg.mxu0
      %vm614 = vcmp.ge.f32.partialorder %v595, 0.0
      %vm615 = vcmp.ge.f32.partialorder %v597, 0.0
      %vm616 = vcmp.ge.f32.partialorder %v600, 0.0
      %vm617 = vcmp.ge.f32.partialorder %v602, 0.0
      %vm618 = vcmp.ge.f32.partialorder %v605, 0.0
      %vm619 = vcmp.ge.f32.partialorder %v607, 0.0
      %vm620 = vcmp.ge.f32.partialorder %v610, 0.0
      %vm621 = vcmp.ge.f32.partialorder %v612, 0.0
      %v622 = vmul.f32 %v595, 0.01
      %v623 = vmul.f32 %v597, 0.01
      %v624 = vmul.f32 %v600, 0.01
      %v625 = vmul.f32 %v602, 0.01
      %v626 = vmul.f32 %v605, 0.01
      %v627 = vmul.f32 %v607, 0.01
      %v628 = vmul.f32 %v610, 0.01
      %v629 = vmul.f32 %v612, 0.01
      %v630 = vsel %vm614, %v595, %v622
      %v631 = vsel %vm615, %v597, %v623
      %v632 = vsel %vm616, %v600, %v624
      %v633 = vsel %vm617, %v602, %v625
      %v634 = vsel %vm618, %v605, %v626
      %v635 = vsel %vm619, %v607, %v627
      %v636 = vsel %vm620, %v610, %v628
      %v637 = vsel %vm621, %v612, %v629
      %646 = vrot.lane.b32.xlu0 %v202, 120
      %v647 = vpop.permute.xlu0 %646
      %648 = vrot.lane.b32.xlu0 %v203, 120
      %v649 = vpop.permute.xlu0 %648
      %650 = vrot.lane.b32.xlu0 %v204, 120
      %v651 = vpop.permute.xlu0 %650
      %652 = vrot.lane.b32.xlu0 %v205, 120
      %v653 = vpop.permute.xlu0 %652
      %654 = vrot.lane.b32.xlu0 %v206, 120
      %v655 = vpop.permute.xlu0 %654
      %656 = vrot.lane.b32.xlu0 %v207, 120
      %v657 = vpop.permute.xlu0 %656
      %658 = vrot.lane.b32.xlu0 %v208, 120
      %v659 = vpop.permute.xlu0 %658
      %660 = vrot.lane.b32.xlu0 %v209, 120
      %v661 = vpop.permute.xlu0 %660
      %vm670 = vcmask 31744
      %v671 = vsel %vm670, %v647, 0.0
      %672 = vadd.xlane.f32.xlu0 %v671
      %v673 = vpop.xlane.xlu0 %672
      %v674 = vsel %vm670, %v649, 0.0
      %675 = vadd.xlane.f32.xlu0 %v674
      %v676 = vpop.xlane.xlu0 %675
      %v677 = vsel %vm670, %v651, 0.0
      %678 = vadd.xlane.f32.xlu0 %v677
      %v679 = vpop.xlane.xlu0 %678
      %v680 = vsel %vm670, %v653, 0.0
      %681 = vadd.xlane.f32.xlu0 %v680
      %v682 = vpop.xlane.xlu0 %681
      %v683 = vsel %vm670, %v655, 0.0
      %684 = vadd.xlane.f32.xlu0 %v683
      %v685 = vpop.xlane.xlu0 %684
      %v686 = vsel %vm670, %v657, 0.0
      %687 = vadd.xlane.f32.xlu0 %v686
      %v688 = vpop.xlane.xlu0 %687
      %v689 = vsel %vm670, %v659, 0.0
      %690 = vadd.xlane.f32.xlu0 %v689
      %v691 = vpop.xlane.xlu0 %690
      %v692 = vsel %vm670, %v661, 0.0
      %693 = vadd.xlane.f32.xlu0 %v692
      %v694 = vpop.xlane.xlu0 %693
      %v695 = vrcp.pop 4.0
      %v696 = vmul.f32 4.0, %v695
      %v697 = vsub.f32 1.0, %v696
      %v698 = vmul.f32 %v695, %v697
      %v699 = vadd.f32 %v695, %v698
      %vm700 = vweird.f32 %v695
      %v701 = vsel %vm700, %v695, %v699
      %v702 = vmul.f32 %v673, %v701
      %v703 = vmul.f32 %v676, %v701
      %v704 = vmul.f32 %v679, %v701
      %v705 = vmul.f32 %v682, %v701
      %v706 = vmul.f32 %v685, %v701
      %v707 = vmul.f32 %v688, %v701
      %v708 = vmul.f32 %v691, %v701
      %v709 = vmul.f32 %v694, %v701
      %v710 = vsub.f32 %v202, %v702
      %v711 = vsub.f32 %v203, %v703
      %v712 = vsub.f32 %v204, %v704
      %v713 = vsub.f32 %v205, %v705
      %v714 = vsub.f32 %v206, %v706
      %v715 = vsub.f32 %v207, %v707
      %v716 = vsub.f32 %v208, %v708
      %v717 = vsub.f32 %v209, %v709
      %v718 = vmul.f32 %v710, %v710
      %v719 = vmul.f32 %v711, %v711
      %v720 = vmul.f32 %v712, %v712
      %v721 = vmul.f32 %v713, %v713
      %v722 = vmul.f32 %v714, %v714
      %v723 = vmul.f32 %v715, %v715
      %v724 = vmul.f32 %v716, %v716
      %v725 = vmul.f32 %v717, %v717
      %734 = vrot.lane.b32.xlu0 %v718, 120
      %v735 = vpop.permute.xlu0 %734
      %736 = vrot.lane.b32.xlu0 %v719, 120
      %v737 = vpop.permute.xlu0 %736
      %738 = vrot.lane.b32.xlu0 %v720, 120
      %v739 = vpop.permute.xlu0 %738
      %740 = vrot.lane.b32.xlu0 %v721, 120
      %v741 = vpop.permute.xlu0 %740
      %742 = vrot.lane.b32.xlu0 %v722, 120
      %v743 = vpop.permute.xlu0 %742
      %744 = vrot.lane.b32.xlu0 %v723, 120
      %v745 = vpop.permute.xlu0 %744
      %746 = vrot.lane.b32.xlu0 %v724, 120
      %v747 = vpop.permute.xlu0 %746
      %748 = vrot.lane.b32.xlu0 %v725, 120
      %v749 = vpop.permute.xlu0 %748
      %v758 = vsel %vm670, %v735, 0.0
      %759 = vadd.xlane.f32.xlu0 %v758
      %v760 = vpop.xlane.xlu0 %759
      %v761 = vsel %vm670, %v737, 0.0
      %762 = vadd.xlane.f32.xlu0 %v761
      %v763 = vpop.xlane.xlu0 %762
      %v764 = vsel %vm670, %v739, 0.0
      %765 = vadd.xlane.f32.xlu0 %v764
      %v766 = vpop.xlane.xlu0 %765
      %v767 = vsel %vm670, %v741, 0.0
      %768 = vadd.xlane.f32.xlu0 %v767
      %v769 = vpop.xlane.xlu0 %768
      %v770 = vsel %vm670, %v743, 0.0
      %771 = vadd.xlane.f32.xlu0 %v770
      %v772 = vpop.xlane.xlu0 %771
      %v773 = vsel %vm670, %v745, 0.0
      %774 = vadd.xlane.f32.xlu0 %v773
      %v775 = vpop.xlane.xlu0 %774
      %v776 = vsel %vm670, %v747, 0.0
      %777 = vadd.xlane.f32.xlu0 %v776
      %v778 = vpop.xlane.xlu0 %777
      %v779 = vsel %vm670, %v749, 0.0
      %780 = vadd.xlane.f32.xlu0 %v779
      %v781 = vpop.xlane.xlu0 %780
      %v782 = vmul.f32 %v760, %v701
      %v783 = vmul.f32 %v763, %v701
      %v784 = vmul.f32 %v766, %v701
      %v785 = vmul.f32 %v769, %v701
      %v786 = vmul.f32 %v772, %v701
      %v787 = vmul.f32 %v775, %v701
      %v788 = vmul.f32 %v778, %v701
      %v789 = vmul.f32 %v781, %v701
      %v790 = vadd.f32 %v782, 1e-05
      %v791 = vadd.f32 %v783, 1e-05
      %v792 = vadd.f32 %v784, 1e-05
      %v793 = vadd.f32 %v785, 1e-05
      %v794 = vadd.f32 %v786, 1e-05
      %v795 = vadd.f32 %v787, 1e-05
      %v796 = vadd.f32 %v788, 1e-05
      %v797 = vadd.f32 %v789, 1e-05
      %v798 = vrsqrt.pop %v790
      %v799 = vmul.f32 %v798, %v790
      %v800 = vmul.f32 %v799, %v798
      %v801 = vmul.f32 0.5, %v800
      %v802 = vsub.f32 1.5, %v801
      %v803 = vmul.f32 %v798, %v802
      %vm804 = vweird.f32 %v790
      %vm805 = vweird.f32 %v798
      %vm806 = vmor %vm804, %vm805
      %v807 = vsel %vm806, %v798, %v803
      %v808 = vrsqrt.pop %v791
      %v809 = vmul.f32 %v808, %v791
      %v810 = vmul.f32 %v809, %v808
      %v811 = vmul.f32 0.5, %v810
      %v812 = vsub.f32 1.5, %v811
      %v813 = vmul.f32 %v808, %v812
      %vm814 = vweird.f32 %v791
      %vm815 = vweird.f32 %v808
      %vm816 = vmor %vm814, %vm815
      %v817 = vsel %vm816, %v808, %v813
      %v818 = vrsqrt.pop %v792
      %v819 = vmul.f32 %v818, %v792
      %v820 = vmul.f32 %v819, %v818
      %v821 = vmul.f32 0.5, %v820
      %v822 = vsub.f32 1.5, %v821
      %v823 = vmul.f32 %v818, %v822
      %vm824 = vweird.f32 %v792
      %vm825 = vweird.f32 %v818
      %vm826 = vmor %vm824, %vm825
      %v827 = vsel %vm826, %v818, %v823
      %v828 = vrsqrt.pop %v793
      %v829 = vmul.f32 %v828, %v793
      %v830 = vmul.f32 %v829, %v828
      %v831 = vmul.f32 0.5, %v830
      %v832 = vsub.f32 1.5, %v831
      %v833 = vmul.f32 %v828, %v832
      %vm834 = vweird.f32 %v793
      %vm835 = vweird.f32 %v828
      %vm836 = vmor %vm834, %vm835
      %v837 = vsel %vm836, %v828, %v833
      %v838 = vrsqrt.pop %v794
      %v839 = vmul.f32 %v838, %v794
      %v840 = vmul.f32 %v839, %v838
      %v841 = vmul.f32 0.5, %v840
      %v842 = vsub.f32 1.5, %v841
      %v843 = vmul.f32 %v838, %v842
      %vm844 = vweird.f32 %v794
      %vm845 = vweird.f32 %v838
      %vm846 = vmor %vm844, %vm845
      %v847 = vsel %vm846, %v838, %v843
      %v848 = vrsqrt.pop %v795
      %v849 = vmul.f32 %v848, %v795
      %v850 = vmul.f32 %v849, %v848
      %v851 = vmul.f32 0.5, %v850
      %v852 = vsub.f32 1.5, %v851
      %v853 = vmul.f32 %v848, %v852
      %vm854 = vweird.f32 %v795
      %vm855 = vweird.f32 %v848
      %vm856 = vmor %vm854, %vm855
      %v857 = vsel %vm856, %v848, %v853
      %v858 = vrsqrt.pop %v796
      %v859 = vmul.f32 %v858, %v796
      %v860 = vmul.f32 %v859, %v858
      %v861 = vmul.f32 0.5, %v860
      %v862 = vsub.f32 1.5, %v861
      %v863 = vmul.f32 %v858, %v862
      %vm864 = vweird.f32 %v796
      %vm865 = vweird.f32 %v858
      %vm866 = vmor %vm864, %vm865
      %v867 = vsel %vm866, %v858, %v863
      %v868 = vrsqrt.pop %v797
      %v869 = vmul.f32 %v868, %v797
      %v870 = vmul.f32 %v869, %v868
      %v871 = vmul.f32 0.5, %v870
      %v872 = vsub.f32 1.5, %v871
      %v873 = vmul.f32 %v868, %v872
      %vm874 = vweird.f32 %v797
      %vm875 = vweird.f32 %v868
      %vm876 = vmor %vm874, %vm875
      %v877 = vsel %vm876, %v868, %v873
      %v878 = vmul.f32 %v710, %v807
      %v879 = vmul.f32 %v711, %v817
      %v880 = vmul.f32 %v712, %v827
      %v881 = vmul.f32 %v713, %v837
      %v882 = vmul.f32 %v714, %v847
      %v883 = vmul.f32 %v715, %v857
      %v884 = vmul.f32 %v716, %v867
      %v885 = vmul.f32 %v717, %v877
      %v886 = vld [vmem:[%s3 + $0x8] sm:$0x1]
      %888 = vset.pattern.permute.xlu0 8
      %889 = vperm.xlu0 %888, %v878
      %v890 = vpop.permute.xlu0 %889
      %893 = vset.pattern.permute.xlu0 8
      %894 = vperm.xlu0 %893, %v879
      %v895 = vpop.permute.xlu0 %894
      %898 = vset.pattern.permute.xlu0 8
      %899 = vperm.xlu0 %898, %v880
      %v900 = vpop.permute.xlu0 %899
      %903 = vset.pattern.permute.xlu0 8
      %904 = vperm.xlu0 %903, %v881
      %v905 = vpop.permute.xlu0 %904
      %908 = vset.pattern.permute.xlu0 8
      %909 = vperm.xlu0 %908, %v882
      %v910 = vpop.permute.xlu0 %909
      %913 = vset.pattern.permute.xlu0 8
      %914 = vperm.xlu0 %913, %v883
      %v915 = vpop.permute.xlu0 %914
      %918 = vset.pattern.permute.xlu0 8
      %919 = vperm.xlu0 %918, %v884
      %v920 = vpop.permute.xlu0 %919
      %923 = vset.pattern.permute.xlu0 8
      %924 = vperm.xlu0 %923, %v885
      %v925 = vpop.permute.xlu0 %924
      %v927 = vperm.slane %v886, 0
      %v928 = vmul.f32 %v890, %v927
      %v929 = vmul.f32 %v895, %v927
      %v930 = vmul.f32 %v900, %v927
      %v931 = vmul.f32 %v905, %v927
      %v932 = vmul.f32 %v910, %v927
      %v933 = vmul.f32 %v915, %v927
      %v934 = vmul.f32 %v920, %v927
      %v935 = vmul.f32 %v925, %v927
      %v936 = vld [vmem:[%s3 + $0x9] sm:$0x1]
      %937 = vset.pattern.permute.xlu0 9
      %938 = vperm.xlu0 %937, %v878
      %v939 = vpop.permute.xlu0 %938
      %941 = vset.pattern.permute.xlu0 9
      %942 = vperm.xlu0 %941, %v879
      %v943 = vpop.permute.xlu0 %942
      %945 = vset.pattern.permute.xlu0 9
      %946 = vperm.xlu0 %945, %v880
      %v947 = vpop.permute.xlu0 %946
      %949 = vset.pattern.permute.xlu0 9
      %950 = vperm.xlu0 %949, %v881
      %v951 = vpop.permute.xlu0 %950
      %953 = vset.pattern.permute.xlu0 9
      %954 = vperm.xlu0 %953, %v882
      %v955 = vpop.permute.xlu0 %954
      %957 = vset.pattern.permute.xlu0 9
      %958 = vperm.xlu0 %957, %v883
      %v959 = vpop.permute.xlu0 %958
      %961 = vset.pattern.permute.xlu0 9
      %962 = vperm.xlu0 %961, %v884
      %v963 = vpop.permute.xlu0 %962
      %965 = vset.pattern.permute.xlu0 9
      %966 = vperm.xlu0 %965, %v885
      %v967 = vpop.permute.xlu0 %966
      %v969 = vperm.slane %v936, 0
      %v970 = vmul.f32 %v939, %v969
      %v971 = vmul.f32 %v943, %v969
      %v972 = vmul.f32 %v947, %v969
      %v973 = vmul.f32 %v951, %v969
      %v974 = vmul.f32 %v955, %v969
      %v975 = vmul.f32 %v959, %v969
      %v976 = vmul.f32 %v963, %v969
      %v977 = vmul.f32 %v967, %v969
      %v978 = vadd.f32 %v928, %v970
      %v979 = vadd.f32 %v929, %v971
      %v980 = vadd.f32 %v930, %v972
      %v981 = vadd.f32 %v931, %v973
      %v982 = vadd.f32 %v932, %v974
      %v983 = vadd.f32 %v933, %v975
      %v984 = vadd.f32 %v934, %v976
      %v985 = vadd.f32 %v935, %v977
      %v986 = vld [vmem:[%s3 + $0xa] sm:$0x1]
      %987 = vset.pattern.permute.xlu0 10
      %988 = vperm.xlu0 %987, %v878
      %v989 = vpop.permute.xlu0 %988
      %991 = vset.pattern.permute.xlu0 10
      %992 = vperm.xlu0 %991, %v879
      %v993 = vpop.permute.xlu0 %992
      %995 = vset.pattern.permute.xlu0 10
      %996 = vperm.xlu0 %995, %v880
      %v997 = vpop.permute.xlu0 %996
      %999 = vset.pattern.permute.xlu0 10
      %1000 = vperm.xlu0 %999, %v881
      %v1001 = vpop.permute.xlu0 %1000
      %1003 = vset.pattern.permute.xlu0 10
      %1004 = vperm.xlu0 %1003, %v882
      %v1005 = vpop.permute.xlu0 %1004
      %1007 = vset.pattern.permute.xlu0 10
      %1008 = vperm.xlu0 %1007, %v883
      %v1009 = vpop.permute.xlu0 %1008
      %1011 = vset.pattern.permute.xlu0 10
      %1012 = vperm.xlu0 %1011, %v884
      %v1013 = vpop.permute.xlu0 %1012
      %1015 = vset.pattern.permute.xlu0 10
      %1016 = vperm.xlu0 %1015, %v885
      %v1017 = vpop.permute.xlu0 %1016
      %v1019 = vperm.slane %v986, 0
      %v1020 = vmul.f32 %v989, %v1019
      %v1021 = vmul.f32 %v993, %v1019
      %v1022 = vmul.f32 %v997, %v1019
      %v1023 = vmul.f32 %v1001, %v1019
      %v1024 = vmul.f32 %v1005, %v1019
      %v1025 = vmul.f32 %v1009, %v1019
      %v1026 = vmul.f32 %v1013, %v1019
      %v1027 = vmul.f32 %v1017, %v1019
      %v1028 = vadd.f32 %v978, %v1020
      %v1029 = vadd.f32 %v979, %v1021
      %v1030 = vadd.f32 %v980, %v1022
      %v1031 = vadd.f32 %v981, %v1023
      %v1032 = vadd.f32 %v982, %v1024
      %v1033 = vadd.f32 %v983, %v1025
      %v1034 = vadd.f32 %v984, %v1026
      %v1035 = vadd.f32 %v985, %v1027
      %v1036 = vld [vmem:[%s3 + $0xb] sm:$0x1]
      %1037 = vset.pattern.permute.xlu0 11
      %1038 = vperm.xlu0 %1037, %v878
      %v1039 = vpop.permute.xlu0 %1038
      %1041 = vset.pattern.permute.xlu0 11
      %1042 = vperm.xlu0 %1041, %v879
      %v1043 = vpop.permute.xlu0 %1042
      %1045 = vset.pattern.permute.xlu0 11
      %1046 = vperm.xlu0 %1045, %v880
      %v1047 = vpop.permute.xlu0 %1046
      %1049 = vset.pattern.permute.xlu0 11
      %1050 = vperm.xlu0 %1049, %v881
      %v1051 = vpop.permute.xlu0 %1050
      %1053 = vset.pattern.permute.xlu0 11
      %1054 = vperm.xlu0 %1053, %v882
      %v1055 = vpop.permute.xlu0 %1054
      %1057 = vset.pattern.permute.xlu0 11
      %1058 = vperm.xlu0 %1057, %v883
      %v1059 = vpop.permute.xlu0 %1058
      %1061 = vset.pattern.permute.xlu0 11
      %1062 = vperm.xlu0 %1061, %v884
      %v1063 = vpop.permute.xlu0 %1062
      %1065 = vset.pattern.permute.xlu0 11
      %1066 = vperm.xlu0 %1065, %v885
      %v1067 = vpop.permute.xlu0 %1066
      %v1069 = vperm.slane %v1036, 0
      %v1070 = vmul.f32 %v1039, %v1069
      %v1071 = vmul.f32 %v1043, %v1069
      %v1072 = vmul.f32 %v1047, %v1069
      %v1073 = vmul.f32 %v1051, %v1069
      %v1074 = vmul.f32 %v1055, %v1069
      %v1075 = vmul.f32 %v1059, %v1069
      %v1076 = vmul.f32 %v1063, %v1069
      %v1077 = vmul.f32 %v1067, %v1069
      %v1078 = vadd.f32 %v1028, %v1070
      %v1079 = vadd.f32 %v1029, %v1071
      %v1080 = vadd.f32 %v1030, %v1072
      %v1081 = vadd.f32 %v1031, %v1073
      %v1082 = vadd.f32 %v1032, %v1074
      %v1083 = vadd.f32 %v1033, %v1075
      %v1084 = vadd.f32 %v1034, %v1076
      %v1085 = vadd.f32 %v1035, %v1077
      %v1086 = vld [vmem:[%s3 + $0x3] sm:$0x1]
      %v1087 = vperm.slane %v1086, 0
      %v1088 = vadd.f32 %v1078, %v1087
      %v1089 = vadd.f32 %v1079, %v1087
      %v1090 = vadd.f32 %v1080, %v1087
      %v1091 = vadd.f32 %v1081, %v1087
      %v1092 = vadd.f32 %v1082, %v1087
      %v1093 = vadd.f32 %v1083, %v1087
      %v1094 = vadd.f32 %v1084, %v1087
      %v1095 = vadd.f32 %v1085, %v1087
      %vm1096 = vcmp.ge.f32.partialorder %v1088, 0.0
      %vm1097 = vcmp.ge.f32.partialorder %v1089, 0.0
      %vm1098 = vcmp.ge.f32.partialorder %v1090, 0.0
      %vm1099 = vcmp.ge.f32.partialorder %v1091, 0.0
      %vm1100 = vcmp.ge.f32.partialorder %v1092, 0.0
      %vm1101 = vcmp.ge.f32.partialorder %v1093, 0.0
      %vm1102 = vcmp.ge.f32.partialorder %v1094, 0.0
      %vm1103 = vcmp.ge.f32.partialorder %v1095, 0.0
      %v1104 = vmul.f32 %v1088, 0.01
      %v1105 = vmul.f32 %v1089, 0.01
      %v1106 = vmul.f32 %v1090, 0.01
      %v1107 = vmul.f32 %v1091, 0.01
      %v1108 = vmul.f32 %v1092, 0.01
      %v1109 = vmul.f32 %v1093, 0.01
      %v1110 = vmul.f32 %v1094, 0.01
      %v1111 = vmul.f32 %v1095, 0.01
      %v1112 = vsel %vm1096, %v1088, %v1104
      %v1113 = vsel %vm1097, %v1089, %v1105
      %v1114 = vsel %vm1098, %v1090, %v1106
      %v1115 = vsel %vm1099, %v1091, %v1107
      %v1116 = vsel %vm1100, %v1092, %v1108
      %v1117 = vsel %vm1101, %v1093, %v1109
      %v1118 = vsel %vm1102, %v1094, %v1110
      %v1119 = vsel %vm1103, %v1095, %v1111
      %v1120 = vld [vmem:[%s3 + $0xc] sm:$0x1]
      %1122 = vset.pattern.permute.xlu0 0
      %1123 = vperm.xlu0 %1122, %v1112
      %v1124 = vpop.permute.xlu0 %1123
      %1127 = vset.pattern.permute.xlu0 0
      %1128 = vperm.xlu0 %1127, %v1113
      %v1129 = vpop.permute.xlu0 %1128
      %1132 = vset.pattern.permute.xlu0 0
      %1133 = vperm.xlu0 %1132, %v1114
      %v1134 = vpop.permute.xlu0 %1133
      %1137 = vset.pattern.permute.xlu0 0
      %1138 = vperm.xlu0 %1137, %v1115
      %v1139 = vpop.permute.xlu0 %1138
      %1142 = vset.pattern.permute.xlu0 0
      %1143 = vperm.xlu0 %1142, %v1116
      %v1144 = vpop.permute.xlu0 %1143
      %1147 = vset.pattern.permute.xlu0 0
      %1148 = vperm.xlu0 %1147, %v1117
      %v1149 = vpop.permute.xlu0 %1148
      %1152 = vset.pattern.permute.xlu0 0
      %1153 = vperm.xlu0 %1152, %v1118
      %v1154 = vpop.permute.xlu0 %1153
      %1157 = vset.pattern.permute.xlu0 0
      %1158 = vperm.xlu0 %1157, %v1119
      %v1159 = vpop.permute.xlu0 %1158
      %v1161 = vperm.slane %v1120, 0
      %v1162 = vmul.f32 %v1124, %v1161
      %v1163 = vmul.f32 %v1129, %v1161
      %v1164 = vmul.f32 %v1134, %v1161
      %v1165 = vmul.f32 %v1139, %v1161
      %v1166 = vmul.f32 %v1144, %v1161
      %v1167 = vmul.f32 %v1149, %v1161
      %v1168 = vmul.f32 %v1154, %v1161
      %v1169 = vmul.f32 %v1159, %v1161
      %v1170 = vld [vmem:[%s3 + $0xd] sm:$0x1]
      %1171 = vset.pattern.permute.xlu0 1
      %1172 = vperm.xlu0 %1171, %v1112
      %v1173 = vpop.permute.xlu0 %1172
      %1175 = vset.pattern.permute.xlu0 1
      %1176 = vperm.xlu0 %1175, %v1113
      %v1177 = vpop.permute.xlu0 %1176
      %1179 = vset.pattern.permute.xlu0 1
      %1180 = vperm.xlu0 %1179, %v1114
      %v1181 = vpop.permute.xlu0 %1180
      %1183 = vset.pattern.permute.xlu0 1
      %1184 = vperm.xlu0 %1183, %v1115
      %v1185 = vpop.permute.xlu0 %1184
      %1187 = vset.pattern.permute.xlu0 1
      %1188 = vperm.xlu0 %1187, %v1116
      %v1189 = vpop.permute.xlu0 %1188
      %1191 = vset.pattern.permute.xlu0 1
      %1192 = vperm.xlu0 %1191, %v1117
      %v1193 = vpop.permute.xlu0 %1192
      %1195 = vset.pattern.permute.xlu0 1
      %1196 = vperm.xlu0 %1195, %v1118
      %v1197 = vpop.permute.xlu0 %1196
      %1199 = vset.pattern.permute.xlu0 1
      %1200 = vperm.xlu0 %1199, %v1119
      %v1201 = vpop.permute.xlu0 %1200
      %v1203 = vperm.slane %v1170, 0
      %v1204 = vmul.f32 %v1173, %v1203
      %v1205 = vmul.f32 %v1177, %v1203
      %v1206 = vmul.f32 %v1181, %v1203
      %v1207 = vmul.f32 %v1185, %v1203
      %v1208 = vmul.f32 %v1189, %v1203
      %v1209 = vmul.f32 %v1193, %v1203
      %v1210 = vmul.f32 %v1197, %v1203
      %v1211 = vmul.f32 %v1201, %v1203
      %v1212 = vadd.f32 %v1162, %v1204
      %v1213 = vadd.f32 %v1163, %v1205
      %v1214 = vadd.f32 %v1164, %v1206
      %v1215 = vadd.f32 %v1165, %v1207
      %v1216 = vadd.f32 %v1166, %v1208
      %v1217 = vadd.f32 %v1167, %v1209
      %v1218 = vadd.f32 %v1168, %v1210
      %v1219 = vadd.f32 %v1169, %v1211
      %v1220 = vld [vmem:[%s3 + $0xe] sm:$0x1]
      %1221 = vset.pattern.permute.xlu0 2
      %1222 = vperm.xlu0 %1221, %v1112
      %v1223 = vpop.permute.xlu0 %1222
      %1225 = vset.pattern.permute.xlu0 2
      %1226 = vperm.xlu0 %1225, %v1113
      %v1227 = vpop.permute.xlu0 %1226
      %1229 = vset.pattern.permute.xlu0 2
      %1230 = vperm.xlu0 %1229, %v1114
      %v1231 = vpop.permute.xlu0 %1230
      %1233 = vset.pattern.permute.xlu0 2
      %1234 = vperm.xlu0 %1233, %v1115
      %v1235 = vpop.permute.xlu0 %1234
      %1237 = vset.pattern.permute.xlu0 2
      %1238 = vperm.xlu0 %1237, %v1116
      %v1239 = vpop.permute.xlu0 %1238
      %1241 = vset.pattern.permute.xlu0 2
      %1242 = vperm.xlu0 %1241, %v1117
      %v1243 = vpop.permute.xlu0 %1242
      %1245 = vset.pattern.permute.xlu0 2
      %1246 = vperm.xlu0 %1245, %v1118
      %v1247 = vpop.permute.xlu0 %1246
      %1249 = vset.pattern.permute.xlu0 2
      %1250 = vperm.xlu0 %1249, %v1119
      %v1251 = vpop.permute.xlu0 %1250
      %v1253 = vperm.slane %v1220, 0
      %v1254 = vmul.f32 %v1223, %v1253
      %v1255 = vmul.f32 %v1227, %v1253
      %v1256 = vmul.f32 %v1231, %v1253
      %v1257 = vmul.f32 %v1235, %v1253
      %v1258 = vmul.f32 %v1239, %v1253
      %v1259 = vmul.f32 %v1243, %v1253
      %v1260 = vmul.f32 %v1247, %v1253
      %v1261 = vmul.f32 %v1251, %v1253
      %v1262 = vadd.f32 %v1212, %v1254
      %v1263 = vadd.f32 %v1213, %v1255
      %v1264 = vadd.f32 %v1214, %v1256
      %v1265 = vadd.f32 %v1215, %v1257
      %v1266 = vadd.f32 %v1216, %v1258
      %v1267 = vadd.f32 %v1217, %v1259
      %v1268 = vadd.f32 %v1218, %v1260
      %v1269 = vadd.f32 %v1219, %v1261
      %v1270 = vld [vmem:[%s3 + $0xf] sm:$0x1]
      %1271 = vset.pattern.permute.xlu0 3
      %1272 = vperm.xlu0 %1271, %v1112
      %v1273 = vpop.permute.xlu0 %1272
      %1275 = vset.pattern.permute.xlu0 3
      %1276 = vperm.xlu0 %1275, %v1113
      %v1277 = vpop.permute.xlu0 %1276
      %1279 = vset.pattern.permute.xlu0 3
      %1280 = vperm.xlu0 %1279, %v1114
      %v1281 = vpop.permute.xlu0 %1280
      %1283 = vset.pattern.permute.xlu0 3
      %1284 = vperm.xlu0 %1283, %v1115
      %v1285 = vpop.permute.xlu0 %1284
      %1287 = vset.pattern.permute.xlu0 3
      %1288 = vperm.xlu0 %1287, %v1116
      %v1289 = vpop.permute.xlu0 %1288
      %1291 = vset.pattern.permute.xlu0 3
      %1292 = vperm.xlu0 %1291, %v1117
      %v1293 = vpop.permute.xlu0 %1292
      %1295 = vset.pattern.permute.xlu0 3
      %1296 = vperm.xlu0 %1295, %v1118
      %v1297 = vpop.permute.xlu0 %1296
      %1299 = vset.pattern.permute.xlu0 3
      %1300 = vperm.xlu0 %1299, %v1119
      %v1301 = vpop.permute.xlu0 %1300
      %v1303 = vperm.slane %v1270, 0
      %v1304 = vmul.f32 %v1273, %v1303
      %v1305 = vmul.f32 %v1277, %v1303
      %v1306 = vmul.f32 %v1281, %v1303
      %v1307 = vmul.f32 %v1285, %v1303
      %v1308 = vmul.f32 %v1289, %v1303
      %v1309 = vmul.f32 %v1293, %v1303
      %v1310 = vmul.f32 %v1297, %v1303
      %v1311 = vmul.f32 %v1301, %v1303
      %v1312 = vadd.f32 %v1262, %v1304
      %v1313 = vadd.f32 %v1263, %v1305
      %v1314 = vadd.f32 %v1264, %v1306
      %v1315 = vadd.f32 %v1265, %v1307
      %v1316 = vadd.f32 %v1266, %v1308
      %v1317 = vadd.f32 %v1267, %v1309
      %v1318 = vadd.f32 %v1268, %v1310
      %v1319 = vadd.f32 %v1269, %v1311
      %v1320 = vld [vmem:[%s3 + $0x4] sm:$0x1]
      %v1321 = vperm.slane %v1320, 0
      %v1322 = vadd.f32 %v1312, %v1321
      %v1323 = vadd.f32 %v1313, %v1321
      %v1324 = vadd.f32 %v1314, %v1321
      %v1325 = vadd.f32 %v1315, %v1321
      %v1326 = vadd.f32 %v1316, %v1321
      %v1327 = vadd.f32 %v1317, %v1321
      %v1328 = vadd.f32 %v1318, %v1321
      %v1329 = vadd.f32 %v1319, %v1321
      %v1330 = vld [vmem:[%s2 + $0x8] sm:$0xf]
      %v1331 = vld [vmem:[%s2 + $0xc] sm:$0xf]
      %v1332 = vld [vmem:[%s2 + $0x10] sm:$0xf]
      %v1333 = vld [vmem:[%s2 + $0x14] sm:$0xf]
      %v1334 = vld [vmem:[%s2 + $0x18] sm:$0xf]
      %v1335 = vld [vmem:[%s2 + $0x1c] sm:$0xf]
      %v1336 = vld [vmem:[%s2 + $0x20] sm:$0xf]
      %v1337 = vld [vmem:[%s2 + $0x24] sm:$0xf]
      %v1338 = vpack.c.bf16 %v631, %v630
      %v1339 = vpack.c.bf16 %v633, %v632
      %v1340 = vpack.c.bf16 %v635, %v634
      %v1341 = vpack.c.bf16 %v637, %v636
      %v1342 = vld [vmem:[%s3 + $0x10] sm:$0x1]
      %1344 = vset.pattern.permute.xlu0 0
      %1345 = vperm.xlu0 %1344, %v1322
      %v1346 = vpop.permute.xlu0 %1345
      %1349 = vset.pattern.permute.xlu0 0
      %1350 = vperm.xlu0 %1349, %v1323
      %v1351 = vpop.permute.xlu0 %1350
      %1354 = vset.pattern.permute.xlu0 0
      %1355 = vperm.xlu0 %1354, %v1324
      %v1356 = vpop.permute.xlu0 %1355
      %1359 = vset.pattern.permute.xlu0 0
      %1360 = vperm.xlu0 %1359, %v1325
      %v1361 = vpop.permute.xlu0 %1360
      %1364 = vset.pattern.permute.xlu0 0
      %1365 = vperm.xlu0 %1364, %v1326
      %v1366 = vpop.permute.xlu0 %1365
      %1369 = vset.pattern.permute.xlu0 0
      %1370 = vperm.xlu0 %1369, %v1327
      %v1371 = vpop.permute.xlu0 %1370
      %1374 = vset.pattern.permute.xlu0 0
      %1375 = vperm.xlu0 %1374, %v1328
      %v1376 = vpop.permute.xlu0 %1375
      %1379 = vset.pattern.permute.xlu0 0
      %1380 = vperm.xlu0 %1379, %v1329
      %v1381 = vpop.permute.xlu0 %1380
      %v1383 = vperm.slane %v1342, 0
      %v1384 = vmul.f32 %v1346, %v1383
      %v1385 = vmul.f32 %v1351, %v1383
      %v1386 = vmul.f32 %v1356, %v1383
      %v1387 = vmul.f32 %v1361, %v1383
      %v1388 = vmul.f32 %v1366, %v1383
      %v1389 = vmul.f32 %v1371, %v1383
      %v1390 = vmul.f32 %v1376, %v1383
      %v1391 = vmul.f32 %v1381, %v1383
      %v1392 = vld [vmem:[%s3 + $0x11] sm:$0x1]
      %1393 = vset.pattern.permute.xlu0 1
      %1394 = vperm.xlu0 %1393, %v1322
      %v1395 = vpop.permute.xlu0 %1394
      %1397 = vset.pattern.permute.xlu0 1
      %1398 = vperm.xlu0 %1397, %v1323
      %v1399 = vpop.permute.xlu0 %1398
      %1401 = vset.pattern.permute.xlu0 1
      %1402 = vperm.xlu0 %1401, %v1324
      %v1403 = vpop.permute.xlu0 %1402
      %1405 = vset.pattern.permute.xlu0 1
      %1406 = vperm.xlu0 %1405, %v1325
      %v1407 = vpop.permute.xlu0 %1406
      %1409 = vset.pattern.permute.xlu0 1
      %1410 = vperm.xlu0 %1409, %v1326
      %v1411 = vpop.permute.xlu0 %1410
      %1413 = vset.pattern.permute.xlu0 1
      %1414 = vperm.xlu0 %1413, %v1327
      %v1415 = vpop.permute.xlu0 %1414
      %1417 = vset.pattern.permute.xlu0 1
      %1418 = vperm.xlu0 %1417, %v1328
      %v1419 = vpop.permute.xlu0 %1418
      %1421 = vset.pattern.permute.xlu0 1
      %1422 = vperm.xlu0 %1421, %v1329
      %v1423 = vpop.permute.xlu0 %1422
      %v1425 = vperm.slane %v1392, 0
      %v1426 = vmul.f32 %v1395, %v1425
      %v1427 = vmul.f32 %v1399, %v1425
      %v1428 = vmul.f32 %v1403, %v1425
      %v1429 = vmul.f32 %v1407, %v1425
      %v1430 = vmul.f32 %v1411, %v1425
      %v1431 = vmul.f32 %v1415, %v1425
      %v1432 = vmul.f32 %v1419, %v1425
      %v1433 = vmul.f32 %v1423, %v1425
      %v1434 = vadd.f32 %v1384, %v1426
      %v1435 = vadd.f32 %v1385, %v1427
      %v1436 = vadd.f32 %v1386, %v1428
      %v1437 = vadd.f32 %v1387, %v1429
      %v1438 = vadd.f32 %v1388, %v1430
      %v1439 = vadd.f32 %v1389, %v1431
      %v1440 = vadd.f32 %v1390, %v1432
      %v1441 = vadd.f32 %v1391, %v1433
      %v1442 = vld [vmem:[%s3 + $0x12] sm:$0x1]
      %1443 = vset.pattern.permute.xlu0 2
      %1444 = vperm.xlu0 %1443, %v1322
      %v1445 = vpop.permute.xlu0 %1444
      %1447 = vset.pattern.permute.xlu0 2
      %1448 = vperm.xlu0 %1447, %v1323
      %v1449 = vpop.permute.xlu0 %1448
      %1451 = vset.pattern.permute.xlu0 2
      %1452 = vperm.xlu0 %1451, %v1324
      %v1453 = vpop.permute.xlu0 %1452
      %1455 = vset.pattern.permute.xlu0 2
      %1456 = vperm.xlu0 %1455, %v1325
      %v1457 = vpop.permute.xlu0 %1456
      %1459 = vset.pattern.permute.xlu0 2
      %1460 = vperm.xlu0 %1459, %v1326
      %v1461 = vpop.permute.xlu0 %1460
      %1463 = vset.pattern.permute.xlu0 2
      %1464 = vperm.xlu0 %1463, %v1327
      %v1465 = vpop.permute.xlu0 %1464
      %1467 = vset.pattern.permute.xlu0 2
      %1468 = vperm.xlu0 %1467, %v1328
      %v1469 = vpop.permute.xlu0 %1468
      %1471 = vset.pattern.permute.xlu0 2
      %1472 = vperm.xlu0 %1471, %v1329
      %v1473 = vpop.permute.xlu0 %1472
      %v1475 = vperm.slane %v1442, 0
      %v1476 = vmul.f32 %v1445, %v1475
      %v1477 = vmul.f32 %v1449, %v1475
      %v1478 = vmul.f32 %v1453, %v1475
      %v1479 = vmul.f32 %v1457, %v1475
      %v1480 = vmul.f32 %v1461, %v1475
      %v1481 = vmul.f32 %v1465, %v1475
      %v1482 = vmul.f32 %v1469, %v1475
      %v1483 = vmul.f32 %v1473, %v1475
      %v1484 = vadd.f32 %v1434, %v1476
      %v1485 = vadd.f32 %v1435, %v1477
      %v1486 = vadd.f32 %v1436, %v1478
      %v1487 = vadd.f32 %v1437, %v1479
      %v1488 = vadd.f32 %v1438, %v1480
      %v1489 = vadd.f32 %v1439, %v1481
      %v1490 = vadd.f32 %v1440, %v1482
      %v1491 = vadd.f32 %v1441, %v1483
      %v1492 = vld [vmem:[%s3 + $0x13] sm:$0x1]
      %1493 = vset.pattern.permute.xlu0 3
      %1494 = vperm.xlu0 %1493, %v1322
      %v1495 = vpop.permute.xlu0 %1494
      %1497 = vset.pattern.permute.xlu0 3
      %1498 = vperm.xlu0 %1497, %v1323
      %v1499 = vpop.permute.xlu0 %1498
      %1501 = vset.pattern.permute.xlu0 3
      %1502 = vperm.xlu0 %1501, %v1324
      %v1503 = vpop.permute.xlu0 %1502
      %1505 = vset.pattern.permute.xlu0 3
      %1506 = vperm.xlu0 %1505, %v1325
      %v1507 = vpop.permute.xlu0 %1506
      %1509 = vset.pattern.permute.xlu0 3
      %1510 = vperm.xlu0 %1509, %v1326
      %v1511 = vpop.permute.xlu0 %1510
      %1513 = vset.pattern.permute.xlu0 3
      %1514 = vperm.xlu0 %1513, %v1327
      %v1515 = vpop.permute.xlu0 %1514
      %1517 = vset.pattern.permute.xlu0 3
      %1518 = vperm.xlu0 %1517, %v1328
      %v1519 = vpop.permute.xlu0 %1518
      %1521 = vset.pattern.permute.xlu0 3
      %1522 = vperm.xlu0 %1521, %v1329
      %v1523 = vpop.permute.xlu0 %1522
      %v1525 = vperm.slane %v1492, 0
      %v1526 = vmul.f32 %v1495, %v1525
      %v1527 = vmul.f32 %v1499, %v1525
      %v1528 = vmul.f32 %v1503, %v1525
      %v1529 = vmul.f32 %v1507, %v1525
      %v1530 = vmul.f32 %v1511, %v1525
      %v1531 = vmul.f32 %v1515, %v1525
      %v1532 = vmul.f32 %v1519, %v1525
      %v1533 = vmul.f32 %v1523, %v1525
      %v1534 = vadd.f32 %v1484, %v1526
      %v1535 = vadd.f32 %v1485, %v1527
      %v1536 = vadd.f32 %v1486, %v1528
      %v1537 = vadd.f32 %v1487, %v1529
      %v1538 = vadd.f32 %v1488, %v1530
      %v1539 = vadd.f32 %v1489, %v1531
      %v1540 = vadd.f32 %v1490, %v1532
      %v1541 = vadd.f32 %v1491, %v1533
      %v1550 = vunpack.c.l.b16 %v1330
      %v1551 = vunpack.c.l.b16 %v1331
      %v1552 = vunpack.c.l.b16 %v1332
      %v1553 = vunpack.c.l.b16 %v1333
      %v1554 = vunpack.c.l.b16 %v1334
      %v1555 = vunpack.c.l.b16 %v1335
      %v1556 = vunpack.c.l.b16 %v1336
      %v1557 = vunpack.c.l.b16 %v1337
      %v1558 = vpack.c.b16 %v1551, %v1550
      %v1559 = vpack.c.b16 %v1553, %v1552
      %v1560 = vpack.c.b16 %v1555, %v1554
      %v1561 = vpack.c.b16 %v1557, %v1556
      %v1567 = vsel %vm572, %v1338, 0
      %v1570 = vsel %vm572, %v1339, 0
      %v1573 = vsel %vm572, %v1340, 0
      %v1576 = vsel %vm572, %v1341, 0
      %1578 = vmatpush.bf16.msra.mxu0 0
      %1579 = vmatpush.bf16.msra.mxu0 0
      %1580 = vmatpush.bf16.msra.mxu0 0
      %1581 = vmatpush.bf16.msra.mxu0 0
      %1582 = vmatpush.bf16.msra.mxu0 %v1561
      %1583 = vmatpush.bf16.msra.mxu0 %v1560
      %1584 = vmatpush.bf16.msra.mxu0 %v1559
      %1585 = vmatpush.bf16.msra.mxu0 %v1558
      %1586 = vmatmul.bf16.gmra.mxu0 %v1567
      %v1587 = vpop.f32.mrf.mxu0
      %v1588 = vadd.f32 %v1534, %v1587
      %v1589 = vpop.f32.mrf.mxu0
      %v1590 = vadd.f32 %v1535, %v1589
      %1591 = vmatmul.bf16.gmra.mxu0 %v1570
      %v1592 = vpop.f32.mrf.mxu0
      %v1593 = vadd.f32 %v1536, %v1592
      %v1594 = vpop.f32.mrf.mxu0
      %v1595 = vadd.f32 %v1537, %v1594
      %1596 = vmatmul.bf16.gmra.mxu0 %v1573
      %v1597 = vpop.f32.mrf.mxu0
      %v1598 = vadd.f32 %v1538, %v1597
      %v1599 = vpop.f32.mrf.mxu0
      %v1600 = vadd.f32 %v1539, %v1599
      %1601 = vmatmul.bf16.gmra.mxu0 %v1576
      %v1602 = vpop.f32.mrf.mxu0
      %v1603 = vadd.f32 %v1540, %v1602
      %v1604 = vpop.f32.mrf.mxu0
      %v1605 = vadd.f32 %v1541, %v1604
      %1606 = vdwg.mxu0
      %v1607 = vld [vmem:[%s3 + $0x5] sm:$0x1]
      %v1608 = vperm.slane %v1607, 0
      %v1609 = vadd.f32 %v1588, %v1608
      %v1610 = vadd.f32 %v1590, %v1608
      %v1611 = vadd.f32 %v1593, %v1608
      %v1612 = vadd.f32 %v1595, %v1608
      %v1613 = vadd.f32 %v1598, %v1608
      %v1614 = vadd.f32 %v1600, %v1608
      %v1615 = vadd.f32 %v1603, %v1608
      %v1616 = vadd.f32 %v1605, %v1608
      %vm1617 = vcmp.ge.f32.partialorder %v1609, 0.0
      %vm1618 = vcmp.ge.f32.partialorder %v1610, 0.0
      %vm1619 = vcmp.ge.f32.partialorder %v1611, 0.0
      %vm1620 = vcmp.ge.f32.partialorder %v1612, 0.0
      %vm1621 = vcmp.ge.f32.partialorder %v1613, 0.0
      %vm1622 = vcmp.ge.f32.partialorder %v1614, 0.0
      %vm1623 = vcmp.ge.f32.partialorder %v1615, 0.0
      %vm1624 = vcmp.ge.f32.partialorder %v1616, 0.0
      %v1625 = vmul.f32 %v1609, 0.01
      %v1626 = vmul.f32 %v1610, 0.01
      %v1627 = vmul.f32 %v1611, 0.01
      %v1628 = vmul.f32 %v1612, 0.01
      %v1629 = vmul.f32 %v1613, 0.01
      %v1630 = vmul.f32 %v1614, 0.01
      %v1631 = vmul.f32 %v1615, 0.01
      %v1632 = vmul.f32 %v1616, 0.01
      %v1633 = vsel %vm1617, %v1609, %v1625
      %v1634 = vsel %vm1618, %v1610, %v1626
      %v1635 = vsel %vm1619, %v1611, %v1627
      %v1636 = vsel %vm1620, %v1612, %v1628
      %v1637 = vsel %vm1621, %v1613, %v1629
      %v1638 = vsel %vm1622, %v1614, %v1630
      %v1639 = vsel %vm1623, %v1615, %v1631
      %v1640 = vsel %vm1624, %v1616, %v1632
      %v1641 = vld [vmem:[%s2 + $0x28] sm:$0xf]
      %v1642 = vld [vmem:[%s2 + $0x2c] sm:$0xf]
      %v1643 = vld [vmem:[%s2 + $0x30] sm:$0xf]
      %v1644 = vld [vmem:[%s2 + $0x34] sm:$0xf]
      %v1645 = vpack.c.bf16 %v1634, %v1633
      %v1646 = vpack.c.bf16 %v1636, %v1635
      %v1647 = vpack.c.bf16 %v1638, %v1637
      %v1648 = vpack.c.bf16 %v1640, %v1639
      %v1649 = vld [vmem:[%s3 + $0x6] sm:$0x1]
      %v1650 = vperm.slane %v1649, 0
      %v1655 = vunpack.c.l.b16 %v1641
      %v1656 = vunpack.c.l.b16 %v1642
      %v1657 = vunpack.c.l.b16 %v1643
      %v1658 = vunpack.c.l.b16 %v1644
      %v1659 = vpack.c.b16 %v1656, %v1655
      %v1660 = vpack.c.b16 %v1658, %v1657
      %v1664 = vsel %vm263, %v1645, 0
      %v1667 = vsel %vm263, %v1646, 0
      %v1670 = vsel %vm263, %v1647, 0
      %v1673 = vsel %vm263, %v1648, 0
      %1675 = vmatpush.bf16.msra.mxu0 0
      %1676 = vmatpush.bf16.msra.mxu0 0
      %1677 = vmatpush.bf16.msra.mxu0 0
      %1678 = vmatpush.bf16.msra.mxu0 0
      %1679 = vmatpush.bf16.msra.mxu0 0
      %1680 = vmatpush.bf16.msra.mxu0 0
      %1681 = vmatpush.bf16.msra.mxu0 %v1660
      %1682 = vmatpush.bf16.msra.mxu0 %v1659
      %1683 = vmatmul.bf16.gmra.mxu0 %v1664
      %v1684 = vpop.f32.mrf.mxu0
      %v1685 = vadd.f32 %v1650, %v1684
      %v1686 = vpop.f32.mrf.mxu0
      %v1687 = vadd.f32 %v1650, %v1686
      %1688 = vmatmul.bf16.gmra.mxu0 %v1667
      %v1689 = vpop.f32.mrf.mxu0
      %v1690 = vadd.f32 %v1650, %v1689
      %v1691 = vpop.f32.mrf.mxu0
      %v1692 = vadd.f32 %v1650, %v1691
      %1693 = vmatmul.bf16.gmra.mxu0 %v1670
      %v1694 = vpop.f32.mrf.mxu0
      %v1695 = vadd.f32 %v1650, %v1694
      %v1696 = vpop.f32.mrf.mxu0
      %v1697 = vadd.f32 %v1650, %v1696
      %1698 = vmatmul.bf16.gmra.mxu0 %v1673
      %v1699 = vpop.f32.mrf.mxu0
      %v1700 = vadd.f32 %v1650, %v1699
      %v1701 = vpop.f32.mrf.mxu0
      %v1702 = vadd.f32 %v1650, %v1701
      %1703 = vdwg.mxu0
      %vm1704 = vcmp.ge.f32.partialorder %v1685, 0.0
      %vm1705 = vcmp.ge.f32.partialorder %v1687, 0.0
      %vm1706 = vcmp.ge.f32.partialorder %v1690, 0.0
      %vm1707 = vcmp.ge.f32.partialorder %v1692, 0.0
      %vm1708 = vcmp.ge.f32.partialorder %v1695, 0.0
      %vm1709 = vcmp.ge.f32.partialorder %v1697, 0.0
      %vm1710 = vcmp.ge.f32.partialorder %v1700, 0.0
      %vm1711 = vcmp.ge.f32.partialorder %v1702, 0.0
      %v1712 = vmul.f32 %v1685, 0.01
      %v1713 = vmul.f32 %v1687, 0.01
      %v1714 = vmul.f32 %v1690, 0.01
      %v1715 = vmul.f32 %v1692, 0.01
      %v1716 = vmul.f32 %v1695, 0.01
      %v1717 = vmul.f32 %v1697, 0.01
      %v1718 = vmul.f32 %v1700, 0.01
      %v1719 = vmul.f32 %v1702, 0.01
      %v1720 = vsel %vm1704, %v1685, %v1712
      %v1721 = vsel %vm1705, %v1687, %v1713
      %v1722 = vsel %vm1706, %v1690, %v1714
      %v1723 = vsel %vm1707, %v1692, %v1715
      %v1724 = vsel %vm1708, %v1695, %v1716
      %v1725 = vsel %vm1709, %v1697, %v1717
      %v1726 = vsel %vm1710, %v1700, %v1718
      %v1727 = vsel %vm1711, %v1702, %v1719
      %v1728 = vld [vmem:[%s2 + $0x38] sm:$0xf]
      %v1729 = vld [vmem:[%s2 + $0x3c] sm:$0xf]
      %v1730 = vld [vmem:[%s2 + $0x40] sm:$0xf]
      %v1731 = vld [vmem:[%s2 + $0x44] sm:$0xf]
      %v1732 = vpack.c.bf16 %v1721, %v1720
      %v1733 = vpack.c.bf16 %v1723, %v1722
      %v1734 = vpack.c.bf16 %v1725, %v1724
      %v1735 = vpack.c.bf16 %v1727, %v1726
      %v1736 = vld [vmem:[%s3 + $0x7] sm:$0x1]
      %v1737 = vperm.slane %v1736, 0
      %v1742 = vunpack.c.l.b16 %v1728
      %v1743 = vunpack.c.l.b16 %v1729
      %v1744 = vunpack.c.l.b16 %v1730
      %v1745 = vunpack.c.l.b16 %v1731
      %v1746 = vpack.c.b16 %v1743, %v1742
      %v1747 = vpack.c.b16 %v1745, %v1744
      %v1751 = vsel %vm263, %v1732, 0
      %v1754 = vsel %vm263, %v1733, 0
      %v1757 = vsel %vm263, %v1734, 0
      %v1760 = vsel %vm263, %v1735, 0
      %1762 = vmatpush.bf16.msra.mxu0 0
      %1763 = vmatpush.bf16.msra.mxu0 0
      %1764 = vmatpush.bf16.msra.mxu0 0
      %1765 = vmatpush.bf16.msra.mxu0 0
      %1766 = vmatpush.bf16.msra.mxu0 0
      %1767 = vmatpush.bf16.msra.mxu0 0
      %1768 = vmatpush.bf16.msra.mxu0 %v1747
      %1769 = vmatpush.bf16.msra.mxu0 %v1746
      %1770 = vmatmul.bf16.gmra.mxu0 %v1751
      %v1771 = vpop.f32.mrf.mxu0
      %v1772 = vadd.f32 %v1737, %v1771
      %v1773 = vpop.f32.mrf.mxu0
      %v1774 = vadd.f32 %v1737, %v1773
      %1775 = vmatmul.bf16.gmra.mxu0 %v1754
      %v1776 = vpop.f32.mrf.mxu0
      %v1777 = vadd.f32 %v1737, %v1776
      %v1778 = vpop.f32.mrf.mxu0
      %v1779 = vadd.f32 %v1737, %v1778
      %1780 = vmatmul.bf16.gmra.mxu0 %v1757
      %v1781 = vpop.f32.mrf.mxu0
      %v1782 = vadd.f32 %v1737, %v1781
      %v1783 = vpop.f32.mrf.mxu0
      %v1784 = vadd.f32 %v1737, %v1783
      %1785 = vmatmul.bf16.gmra.mxu0 %v1760
      %v1786 = vpop.f32.mrf.mxu0
      %v1787 = vadd.f32 %v1737, %v1786
      %v1788 = vpop.f32.mrf.mxu0
      %v1789 = vadd.f32 %v1737, %v1788
      %1790 = vdwg.mxu0
      %1791 = vst.msk [vmem:[%s199] sm:$0xff] %vm263, %v1772
      %1792 = vst.msk [vmem:[%s199 + $0x8] sm:$0xff] %vm263, %v1774
      %1793 = vst.msk [vmem:[%s199 + $0x10] sm:$0xff] %vm263, %v1777
      %1794 = vst.msk [vmem:[%s199 + $0x18] sm:$0xff] %vm263, %v1779
      %1795 = vst.msk [vmem:[%s199 + $0x20] sm:$0xff] %vm263, %v1782
      %1796 = vst.msk [vmem:[%s199 + $0x28] sm:$0xff] %vm263, %v1784
      %1797 = vst.msk [vmem:[%s199 + $0x30] sm:$0xff] %vm263, %v1787
      %1798 = vst.msk [vmem:[%s199 + $0x38] sm:$0xff] %vm263, %v1789
      %s1799 = smul.u32 8, %s15
      %p1800 = scmp.lt.s32.totalorder %s1799, 31
      %s1801 = scalar_select %p1800, %s1799, 31
      %s1802 = smul.addr %s1801, 8
      %s1803 = scalar_lea.vmem %s4, %s1802
      // Predicated region
      $region37: #{item_encoder_forward.1} parent=35 // pred_check
        %p1804 = pneg %p122
      $region38: #{item_encoder_forward.1} parent=35 // pred_check_branch
        %1806 = sbr.rel (%p1804) target = $region40
      $region39: #{item_encoder_forward.1} parent=35 // pred_region
        %s1807 = smul.u32 8, %s15
      $region40: #{item_encoder_forward.1} parent=35 // pred_fallthru
        _
    $region36: #{item_encoder_forward.1} parent=5 // pred_fallthru
      _
    %p1808 = scmp.le.s32.totalorder 2, %s10
    // Predicated region
    $region41: #{item_encoder_forward.1} parent=5 // pred_check
      %p1809 = pneg %p1808
    $region42: #{item_encoder_forward.1} parent=5 // pred_check_branch
      %1811 = sbr.rel (%p1809) target = $region44
    $region43: #{item_encoder_forward.1} parent=5 // pred_region
      %s1812 = ssub.s32 %s10, 2
      // Predicated region
      $region45: #{item_encoder_forward.1} parent=43 // pred_check
        %p1813 = pneg %p128
      $region46: #{item_encoder_forward.1} parent=43 // pred_check_branch
        %1815 = sbr.rel (%p1813) target = $region48
      $region47: #{item_encoder_forward.1} parent=43 // pred_region
        %s1816 = smul.u32 8, %s16
        %p1817 = scmp.lt.s32.totalorder %s1816, 31
        %s1818 = scalar_select %p1817, %s1816, 31
        %s1819 = smul.addr %s1818, 8
        %s1820 = scalar_lea.vmem %s4, %s1819
      $region48: #{item_encoder_forward.1} parent=43 // pred_fallthru
        _
    $region44: #{item_encoder_forward.1} parent=5 // pred_fallthru
      _
  $region6: #{item_encoder_forward.1} parent=0 // loop_footer
    %s14 = sadd.s32 1, %s10
  $region7: #{item_encoder_forward.1} parent=0 // loop_footer_branch
    %9 = sbr.rel target = $region3
  $region8: #{item_encoder_forward.1} parent=0 // loop_exit
    _

</llo_original>
